<compile_context>
chip_gen: v5e
topology: v5e:2x2
jax: 0.10.0
libtpu: 0.0.40
codegen_flags: <defaults>
</compile_context>

<pallas_src>
import functools

import jax
import jax.numpy as jnp
from jax import lax
from jax.experimental import pallas as pl
from jax.experimental.pallas import tpu as pltpu


def _round_up(x, m):
    return (x + m - 1) // m * m


def _decoder_kernel(x_ref, w_ref, bias_ref, o_ref, patch_ref, *, ke, s, nb, ls, cpad):
    """Composed ConvTranspose2d->ConvTranspose2d as one full correlation.

    x_ref    : (Nb, Cpad, FL)  zero-padded inputs, flattened with row stride S
    w_ref    : (1, Kp)         composed+flipped weight, K ordered (kh, kw, cin_pad8)
    bias_ref : (1, Nb*LS)      striped bias map (b2 + conv_transpose of b1 field)
    o_ref    : (1, Nb*LS)      striped outputs, Nb images stacked along lanes
    patch_ref: (Kp, Nb*LS)     VMEM im2col scratch (fully rewritten every step)
    """
    # im2col: one aligned (Cpad x LS) store per (tap, image).  Channels are padded
    # to 8 in the DATA, so every store starts on an 8-sublane boundary, covers full
    # lanes (LS multiple of 128), and no patch row is ever left uninitialized.
    for t in range(ke * ke):
        kh, kw = divmod(t, ke)
        start = kh * s + kw
        for b in range(nb):
            patch_ref[t * cpad:(t + 1) * cpad, b * ls:(b + 1) * ls] = (
                x_ref[b, :, start:start + ls])

    # Single MXU matmul over all taps/channels and all stacked output pixels,
    # then one bias add and one lane-dense bulk store.
    y = jnp.dot(w_ref[...], patch_ref[...], preferred_element_type=jnp.float32)
    o_ref[...] = (y + bias_ref[...]).astype(o_ref.dtype)
    # TODO(synk): on v7x, per-tap accumulated matmuls reading x_ref shifted slices
    # directly (MRB in-place accumulation) would skip the patch scratch entirely;
    # on v5e/v6e (MRF) the single im2col+matmul is the safer default.
    # TODO(synk): for large resolutions, add an output-row (Ho) grid axis so the
    # patch scratch stays under the v7x 64 MiB VMEM ceiling.


def _ref_conv_transpose2d(x, w, b):
    """Pure-JAX reference for ConvTranspose2d (stride=1, padding=0)."""
    cin, cout, kh, kw = w.shape
    rhs = jnp.transpose(w, (1, 0, 2, 3))[:, :, ::-1, ::-1]   # OIHW, spatially flipped
    y = lax.conv_general_dilated(
        x, rhs, window_strides=(1, 1),
        padding=[(kh - 1, kh - 1), (kw - 1, kw - 1)],
        dimension_numbers=("NCHW", "OIHW", "NCHW"))
    return y + b.reshape(1, cout, 1, 1)


def _decoder_pallas(x, w_mat, b1, w2, b2, *, k1, k2):
    """x: (N, Cin, H, W) NCHW.  Returns (N, 1, H+K1+K2-2, W+K1+K2-2) NCHW."""
    n, cin, h, w = x.shape
    ke = k1 + k2 - 1                 # effective composed kernel size
    p = ke - 1
    cpad = _round_up(cin, 8)
    kp = w_mat.shape[1]
    assert kp == ke * ke * cpad, (kp, ke, cpad)

    ho2, wo2 = h + p, w + p          # final output spatial size
    hp = h + 2 * p                   # padded input height
    s = w + 2 * p                    # shared flat row stride (= padded input width)
    ls = _round_up(ho2 * s, 128)     # per-image output stripe (lane-dense)
    fl = _round_up(max(hp * s, p * (s + 1) + ls), 128)   # padded-input flat length

    # Batch blocking: stack Nb images along the matmul M dimension, but keep the
    # grid >= 2 steps when N >= 2 so both v7x TensorCores get work.
    patch_bytes_per_image = kp * ls * 4
    nb = max(1, min(8, (6 * 1024 * 1024) // patch_bytes_per_image))
    nb = min(nb, n)
    if n >= 2:
        nb = min(nb, (n + 1) // 2)
    g = -(-n // nb)
    n_pad = g * nb

    # Bias map = b2 + conv_transpose(constant b1 field ; w2).  Depends only on
    # closure constants and static shapes -> constant-folded by XLA under jit.
    ho1, wo1 = h + k1 - 1, w + k1 - 1
    c1 = b1.shape[0]
    b1_field = jnp.broadcast_to(b1.reshape(1, c1, 1, 1), (1, c1, ho1, wo1))
    bias_map = _ref_conv_transpose2d(b1_field, w2, b2)            # (1,1,Ho2,Wo2)
    bias_stripe = jnp.pad(bias_map, ((0, 0), (0, 0), (0, 0), (0, s - wo2)))
    bias_stripe = bias_stripe.reshape(1, ho2 * s)
    bias_stripe = jnp.pad(bias_stripe, ((0, 0), (0, ls - ho2 * s)))
    bias_tiled = jnp.tile(bias_stripe, (1, nb)).astype(jnp.float32)

    # Input glue (cheap XLA ops): pad batch/channels/space, flatten with stride S.
    xp = jnp.pad(x.astype(jnp.float32),
                 ((0, n_pad - n), (0, cpad - cin), (p, p), (p, p)))
    x_flat = xp.reshape(n_pad, cpad, hp * s)
    x_flat = jnp.pad(x_flat, ((0, 0), (0, 0), (0, fl - hp * s)))

    kernel = functools.partial(_decoder_kernel, ke=ke, s=s, nb=nb, ls=ls, cpad=cpad)

    out_flat = pl.pallas_call(
        kernel,
        out_shape=jax.ShapeDtypeStruct((g, 1, nb * ls), x.dtype),
        grid=(g,),
        in_specs=[
            pl.BlockSpec((nb, cpad, fl), lambda i: (i, 0, 0)),
            pl.BlockSpec((1, kp), lambda i: (0, 0)),
            pl.BlockSpec((1, nb * ls), lambda i: (0, 0)),
        ],
        out_specs=pl.BlockSpec((None, 1, nb * ls), lambda i: (i, 0, 0)),
        scratch_shapes=[
            pltpu.VMEM((kp, nb * ls), jnp.float32),   # single im2col scratch
        ],
        compiler_params=pltpu.CompilerParams(
            dimension_semantics=("parallel",),
            vmem_limit_bytes=32 * 1024 * 1024),
    )(x_flat, w_mat, bias_tiled)

    # Striped (G, 1, Nb*LS) -> NCHW (N, 1, Ho2, Wo2); reshape+slice are cheap XLA ops.
    out = out_flat.reshape(n_pad, ls)[:n, :ho2 * s]
    return out.reshape(n, 1, ho2, s)[:, :, :, :wo2]


def _compose_conv_transpose_weights(w1, w2):
    """w1:(Cin,C1,K1,K1), w2:(C1,1,K2,K2) -> effective (Cin,1,K1+K2-1,K1+K2-1).

    Two stride-1/pad-0 ConvTranspose2d layers with no activation between them
    compose into one: w_eff[ci,o,a+p,b+q] = sum_c1 w1[ci,c1,a,b] * w2[c1,o,p,q].
    """
    cin, c1, k1, _ = w1.shape
    _, co, k2, _ = w2.shape
    ke = k1 + k2 - 1
    w1 = jnp.asarray(w1, jnp.float32)
    w2 = jnp.asarray(w2, jnp.float32)
    w_eff = jnp.zeros((cin, co, ke, ke), jnp.float32)
    for pq in range(k2 * k2):
        p_, q_ = divmod(pq, k2)
        contrib = jnp.einsum("xcab,co->xoab", w1, w2[:, :, p_, q_])
        w_eff = w_eff.at[:, :, p_:p_ + k1, q_:q_ + k1].add(contrib)
    return w_eff


def _prep_matmul_weight(w_eff, cpad):
    """(Cin,1,Ke,Ke) -> (1, Ke*Ke*Cpad) row vector, K ordered (kh, kw, cin_pad8).

    ConvTranspose2d (stride=1, pad=0) == full-padded correlation with the spatially
    flipped kernel; extra channel columns are zero (they pair with zero-padded data).
    """
    cin, co, ke, _ = w_eff.shape
    wk = jnp.transpose(w_eff[:, :, ::-1, ::-1], (2, 3, 0, 1))   # (Ke, Ke, Cin, 1)
    wk = jnp.pad(wk, ((0, 0), (0, 0), (0, cpad - cin), (0, 0)))  # (Ke, Ke, Cpad, 1)
    return wk.reshape(ke * ke * cpad, co).T.astype(jnp.float32)  # (1, Kp)


def make_decoder_forward(params):
    """One-time parameter preprocessing (hoisted off the forward path) + jit."""
    cin, c1, k1, _ = params["w1"].shape
    c1b, cout2, k2, _ = params["w2"].shape
    assert c1b == c1 and cout2 == 1, (params["w1"].shape, params["w2"].shape)

    cpad = _round_up(cin, 8)
    w_eff = _compose_conv_transpose_weights(params["w1"], params["w2"])
    w_mat = _prep_matmul_weight(w_eff, cpad)

    b1 = jnp.asarray(params["b1"], jnp.float32)
    w2 = jnp.asarray(params["w2"], jnp.float32)
    b2 = jnp.asarray(params["b2"], jnp.float32)

    # TODO(synk): for v6e/v7x serving, cast w_mat and the im2col patches to bfloat16
    # (keep preferred_element_type=f32 and the bias math in f32) and loosen the test
    # tolerance accordingly.
    fwd = functools.partial(_decoder_pallas, w_mat=w_mat, b1=b1, w2=w2, b2=b2,
                            k1=k1, k2=k2)
    return jax.jit(fwd)


if __name__ == "__main__":
    key = jax.random.PRNGKey(0)
    ka, kb, kc, kd, ke_ = jax.random.split(key, 5)

    # Shapes consistent with Decoder(in_channel=4, out_channel=8, k1=3, k2=3)
    N, Cin, H, W = 2, 4, 16, 16
    C1, K1, K2 = 8, 3, 3

    x = jax.random.normal(ka, (N, Cin, H, W), jnp.float32)
    params = {
        "w1": jax.random.normal(kb, (Cin, C1, K1, K1), jnp.float32) * 0.1,
        "b1": jax.random.normal(kc, (C1,), jnp.float32) * 0.1,
        "w2": jax.random.normal(kd, (C1, 1, K2, K2), jnp.float32) * 0.1,
        "b2": jax.random.normal(ke_, (1,), jnp.float32) * 0.1,
    }

    forward = make_decoder_forward(params)        # one-time prep + jit
    out = jax.block_until_ready(forward(x))

    # Correctness check against a pure-JAX reference of the same semantics
    # (two sequential ConvTranspose2d layers, no activation — matches the
    # original PyTorch Decoder.forward).
    ref = _ref_conv_transpose2d(
        _ref_conv_transpose2d(x, params["w1"], params["b1"]),
        params["w2"], params["b2"])
    assert out.shape == (N, 1, H + K1 + K2 - 2, W + K1 + K2 - 2), out.shape
    assert jnp.allclose(out, ref, atol=5e-4, rtol=5e-4), \
        float(jnp.max(jnp.abs(out - ref)))

    print("KERNEL_OK")
</pallas_src>

<mosaic_0001>
module attributes {stable_mosaic.version = 11 : i64} {
  func.func @_decoder_kernel(%arg0: i32, %arg1: memref<1x8x640xf32, #tpu.memory_space<vmem>>, %arg2: memref<1x200xf32, #tpu.memory_space<vmem>>, %arg3: memref<1x512xf32, #tpu.memory_space<vmem>>, %arg4: memref<1x1x512xf32, #tpu.memory_space<vmem>>, %arg5: memref<200x512xf32, #tpu.memory_space<vmem>>) attributes {dimension_semantics = [#tpu.dimension_semantics<parallel>], iteration_bounds = array<i64: 2>, scalar_prefetch = 0 : i64, scratch_operands = 1 : i64, tpu.core_type = #tpu.core_type<tc>, window_params = [{transform_indices = @transform_0, window_bounds = array<i64: 1, 8, 640>}, {pipeline_mode = #tpu.pipeline_mode<synchronous>, transform_indices = @transform_1, window_bounds = array<i64: 1, 200>}, {pipeline_mode = #tpu.pipeline_mode<synchronous>, transform_indices = @transform_2, window_bounds = array<i64: 1, 512>}, {transform_indices = @transform_3, window_bounds = array<i64: 1, 1, 512>}]} {
    %c0 = arith.constant 0 : index
    %c0_0 = arith.constant 0 : index
    %c0_1 = arith.constant 0 : index
    %0 = vector.load %arg1[%c0, %c0_0, %c0_1] : memref<1x8x640xf32, #tpu.memory_space<vmem>>, vector<1x8x512xf32>
    %1 = vector.shape_cast %0 : vector<1x8x512xf32> to vector<8x512xf32>
    %c0_2 = arith.constant 0 : index
    %c0_3 = arith.constant 0 : index
    %2 = vector.load %arg5[%c0_2, %c0_3] : memref<200x512xf32, #tpu.memory_space<vmem>>, vector<8x512xf32>
    tpu.vector_store %arg5[%c0_2, %c0_3], %1 {strides = array<i32>} : memref<200x512xf32, #tpu.memory_space<vmem>>, vector<8x512xf32>,
    %c0_4 = arith.constant 0 : index
    %c0_5 = arith.constant 0 : index
    %c1 = arith.constant 1 : index
    %3 = vector.load %arg1[%c0_4, %c0_5, %c1] : memref<1x8x640xf32, #tpu.memory_space<vmem>>, vector<1x8x512xf32>
    %4 = vector.shape_cast %3 : vector<1x8x512xf32> to vector<8x512xf32>
    %c8 = arith.constant 8 : index
    %c0_6 = arith.constant 0 : index
    %5 = vector.load %arg5[%c8, %c0_6] : memref<200x512xf32, #tpu.memory_space<vmem>>, vector<8x512xf32>
    tpu.vector_store %arg5[%c8, %c0_6], %4 {strides = array<i32>} : memref<200x512xf32, #tpu.memory_space<vmem>>, vector<8x512xf32>,
    %c0_7 = arith.constant 0 : index
    %c0_8 = arith.constant 0 : index
    %c2 = arith.constant 2 : index
    %6 = vector.load %arg1[%c0_7, %c0_8, %c2] : memref<1x8x640xf32, #tpu.memory_space<vmem>>, vector<1x8x512xf32>
    %7 = vector.shape_cast %6 : vector<1x8x512xf32> to vector<8x512xf32>
    %c16 = arith.constant 16 : index
    %c0_9 = arith.constant 0 : index
    %8 = vector.load %arg5[%c16, %c0_9] : memref<200x512xf32, #tpu.memory_space<vmem>>, vector<8x512xf32>
    tpu.vector_store %arg5[%c16, %c0_9], %7 {strides = array<i32>} : memref<200x512xf32, #tpu.memory_space<vmem>>, vector<8x512xf32>,
    %c0_10 = arith.constant 0 : index
    %c0_11 = arith.constant 0 : index
    %c3 = arith.constant 3 : index
    %9 = vector.load %arg1[%c0_10, %c0_11, %c3] : memref<1x8x640xf32, #tpu.memory_space<vmem>>, vector<1x8x512xf32>
    %10 = vector.shape_cast %9 : vector<1x8x512xf32> to vector<8x512xf32>
    %c24 = arith.constant 24 : index
    %c0_12 = arith.constant 0 : index
    %11 = vector.load %arg5[%c24, %c0_12] : memref<200x512xf32, #tpu.memory_space<vmem>>, vector<8x512xf32>
    tpu.vector_store %arg5[%c24, %c0_12], %10 {strides = array<i32>} : memref<200x512xf32, #tpu.memory_space<vmem>>, vector<8x512xf32>,
    %c0_13 = arith.constant 0 : index
    %c0_14 = arith.constant 0 : index
    %c4 = arith.constant 4 : index
    %12 = vector.load %arg1[%c0_13, %c0_14, %c4] : memref<1x8x640xf32, #tpu.memory_space<vmem>>, vector<1x8x512xf32>
    %13 = vector.shape_cast %12 : vector<1x8x512xf32> to vector<8x512xf32>
    %c32 = arith.constant 32 : index
    %c0_15 = arith.constant 0 : index
    %14 = vector.load %arg5[%c32, %c0_15] : memref<200x512xf32, #tpu.memory_space<vmem>>, vector<8x512xf32>
    tpu.vector_store %arg5[%c32, %c0_15], %13 {strides = array<i32>} : memref<200x512xf32, #tpu.memory_space<vmem>>, vector<8x512xf32>,
    %c0_16 = arith.constant 0 : index
    %c0_17 = arith.constant 0 : index
    %c24_18 = arith.constant 24 : index
    %15 = vector.load %arg1[%c0_16, %c0_17, %c24_18] : memref<1x8x640xf32, #tpu.memory_space<vmem>>, vector<1x8x512xf32>
    %16 = vector.shape_cast %15 : vector<1x8x512xf32> to vector<8x512xf32>
    %c40 = arith.constant 40 : index
    %c0_19 = arith.constant 0 : index
    %17 = vector.load %arg5[%c40, %c0_19] : memref<200x512xf32, #tpu.memory_space<vmem>>, vector<8x512xf32>
    tpu.vector_store %arg5[%c40, %c0_19], %16 {strides = array<i32>} : memref<200x512xf32, #tpu.memory_space<vmem>>, vector<8x512xf32>,
    %c0_20 = arith.constant 0 : index
    %c0_21 = arith.constant 0 : index
    %c25 = arith.constant 25 : index
    %18 = vector.load %arg1[%c0_20, %c0_21, %c25] : memref<1x8x640xf32, #tpu.memory_space<vmem>>, vector<1x8x512xf32>
    %19 = vector.shape_cast %18 : vector<1x8x512xf32> to vector<8x512xf32>
    %c48 = arith.constant 48 : index
    %c0_22 = arith.constant 0 : index
    %20 = vector.load %arg5[%c48, %c0_22] : memref<200x512xf32, #tpu.memory_space<vmem>>, vector<8x512xf32>
    tpu.vector_store %arg5[%c48, %c0_22], %19 {strides = array<i32>} : memref<200x512xf32, #tpu.memory_space<vmem>>, vector<8x512xf32>,
    %c0_23 = arith.constant 0 : index
    %c0_24 = arith.constant 0 : index
    %c26 = arith.constant 26 : index
    %21 = vector.load %arg1[%c0_23, %c0_24, %c26] : memref<1x8x640xf32, #tpu.memory_space<vmem>>, vector<1x8x512xf32>
    %22 = vector.shape_cast %21 : vector<1x8x512xf32> to vector<8x512xf32>
    %c56 = arith.constant 56 : index
    %c0_25 = arith.constant 0 : index
    %23 = vector.load %arg5[%c56, %c0_25] : memref<200x512xf32, #tpu.memory_space<vmem>>, vector<8x512xf32>
    tpu.vector_store %arg5[%c56, %c0_25], %22 {strides = array<i32>} : memref<200x512xf32, #tpu.memory_space<vmem>>, vector<8x512xf32>,
    %c0_26 = arith.constant 0 : index
    %c0_27 = arith.constant 0 : index
    %c27 = arith.constant 27 : index
    %24 = vector.load %arg1[%c0_26, %c0_27, %c27] : memref<1x8x640xf32, #tpu.memory_space<vmem>>, vector<1x8x512xf32>
    %25 = vector.shape_cast %24 : vector<1x8x512xf32> to vector<8x512xf32>
    %c64 = arith.constant 64 : index
    %c0_28 = arith.constant 0 : index
    %26 = vector.load %arg5[%c64, %c0_28] : memref<200x512xf32, #tpu.memory_space<vmem>>, vector<8x512xf32>
    tpu.vector_store %arg5[%c64, %c0_28], %25 {strides = array<i32>} : memref<200x512xf32, #tpu.memory_space<vmem>>, vector<8x512xf32>,
    %c0_29 = arith.constant 0 : index
    %c0_30 = arith.constant 0 : index
    %c28 = arith.constant 28 : index
    %27 = vector.load %arg1[%c0_29, %c0_30, %c28] : memref<1x8x640xf32, #tpu.memory_space<vmem>>, vector<1x8x512xf32>
    %28 = vector.shape_cast %27 : vector<1x8x512xf32> to vector<8x512xf32>
    %c72 = arith.constant 72 : index
    %c0_31 = arith.constant 0 : index
    %29 = vector.load %arg5[%c72, %c0_31] : memref<200x512xf32, #tpu.memory_space<vmem>>, vector<8x512xf32>
    tpu.vector_store %arg5[%c72, %c0_31], %28 {strides = array<i32>} : memref<200x512xf32, #tpu.memory_space<vmem>>, vector<8x512xf32>,
    %c0_32 = arith.constant 0 : index
    %c0_33 = arith.constant 0 : index
    %c48_34 = arith.constant 48 : index
    %30 = vector.load %arg1[%c0_32, %c0_33, %c48_34] : memref<1x8x640xf32, #tpu.memory_space<vmem>>, vector<1x8x512xf32>
    %31 = vector.shape_cast %30 : vector<1x8x512xf32> to vector<8x512xf32>
    %c80 = arith.constant 80 : index
    %c0_35 = arith.constant 0 : index
    %32 = vector.load %arg5[%c80, %c0_35] : memref<200x512xf32, #tpu.memory_space<vmem>>, vector<8x512xf32>
    tpu.vector_store %arg5[%c80, %c0_35], %31 {strides = array<i32>} : memref<200x512xf32, #tpu.memory_space<vmem>>, vector<8x512xf32>,
    %c0_36 = arith.constant 0 : index
    %c0_37 = arith.constant 0 : index
    %c49 = arith.constant 49 : index
    %33 = vector.load %arg1[%c0_36, %c0_37, %c49] : memref<1x8x640xf32, #tpu.memory_space<vmem>>, vector<1x8x512xf32>
    %34 = vector.shape_cast %33 : vector<1x8x512xf32> to vector<8x512xf32>
    %c88 = arith.constant 88 : index
    %c0_38 = arith.constant 0 : index
    %35 = vector.load %arg5[%c88, %c0_38] : memref<200x512xf32, #tpu.memory_space<vmem>>, vector<8x512xf32>
    tpu.vector_store %arg5[%c88, %c0_38], %34 {strides = array<i32>} : memref<200x512xf32, #tpu.memory_space<vmem>>, vector<8x512xf32>,
    %c0_39 = arith.constant 0 : index
    %c0_40 = arith.constant 0 : index
    %c50 = arith.constant 50 : index
    %36 = vector.load %arg1[%c0_39, %c0_40, %c50] : memref<1x8x640xf32, #tpu.memory_space<vmem>>, vector<1x8x512xf32>
    %37 = vector.shape_cast %36 : vector<1x8x512xf32> to vector<8x512xf32>
    %c96 = arith.constant 96 : index
    %c0_41 = arith.constant 0 : index
    %38 = vector.load %arg5[%c96, %c0_41] : memref<200x512xf32, #tpu.memory_space<vmem>>, vector<8x512xf32>
    tpu.vector_store %arg5[%c96, %c0_41], %37 {strides = array<i32>} : memref<200x512xf32, #tpu.memory_space<vmem>>, vector<8x512xf32>,
    %c0_42 = arith.constant 0 : index
    %c0_43 = arith.constant 0 : index
    %c51 = arith.constant 51 : index
    %39 = vector.load %arg1[%c0_42, %c0_43, %c51] : memref<1x8x640xf32, #tpu.memory_space<vmem>>, vector<1x8x512xf32>
    %40 = vector.shape_cast %39 : vector<1x8x512xf32> to vector<8x512xf32>
    %c104 = arith.constant 104 : index
    %c0_44 = arith.constant 0 : index
    %41 = vector.load %arg5[%c104, %c0_44] : memref<200x512xf32, #tpu.memory_space<vmem>>, vector<8x512xf32>
    tpu.vector_store %arg5[%c104, %c0_44], %40 {strides = array<i32>} : memref<200x512xf32, #tpu.memory_space<vmem>>, vector<8x512xf32>,
    %c0_45 = arith.constant 0 : index
    %c0_46 = arith.constant 0 : index
    %c52 = arith.constant 52 : index
    %42 = vector.load %arg1[%c0_45, %c0_46, %c52] : memref<1x8x640xf32, #tpu.memory_space<vmem>>, vector<1x8x512xf32>
    %43 = vector.shape_cast %42 : vector<1x8x512xf32> to vector<8x512xf32>
    %c112 = arith.constant 112 : index
    %c0_47 = arith.constant 0 : index
    %44 = vector.load %arg5[%c112, %c0_47] : memref<200x512xf32, #tpu.memory_space<vmem>>, vector<8x512xf32>
    tpu.vector_store %arg5[%c112, %c0_47], %43 {strides = array<i32>} : memref<200x512xf32, #tpu.memory_space<vmem>>, vector<8x512xf32>,
    %c0_48 = arith.constant 0 : index
    %c0_49 = arith.constant 0 : index
    %c72_50 = arith.constant 72 : index
    %45 = vector.load %arg1[%c0_48, %c0_49, %c72_50] : memref<1x8x640xf32, #tpu.memory_space<vmem>>, vector<1x8x512xf32>
    %46 = vector.shape_cast %45 : vector<1x8x512xf32> to vector<8x512xf32>
    %c120 = arith.constant 120 : index
    %c0_51 = arith.constant 0 : index
    %47 = vector.load %arg5[%c120, %c0_51] : memref<200x512xf32, #tpu.memory_space<vmem>>, vector<8x512xf32>
    tpu.vector_store %arg5[%c120, %c0_51], %46 {strides = array<i32>} : memref<200x512xf32, #tpu.memory_space<vmem>>, vector<8x512xf32>,
    %c0_52 = arith.constant 0 : index
    %c0_53 = arith.constant 0 : index
    %c73 = arith.constant 73 : index
    %48 = vector.load %arg1[%c0_52, %c0_53, %c73] : memref<1x8x640xf32, #tpu.memory_space<vmem>>, vector<1x8x512xf32>
    %49 = vector.shape_cast %48 : vector<1x8x512xf32> to vector<8x512xf32>
    %c128 = arith.constant 128 : index
    %c0_54 = arith.constant 0 : index
    %50 = vector.load %arg5[%c128, %c0_54] : memref<200x512xf32, #tpu.memory_space<vmem>>, vector<8x512xf32>
    tpu.vector_store %arg5[%c128, %c0_54], %49 {strides = array<i32>} : memref<200x512xf32, #tpu.memory_space<vmem>>, vector<8x512xf32>,
    %c0_55 = arith.constant 0 : index
    %c0_56 = arith.constant 0 : index
    %c74 = arith.constant 74 : index
    %51 = vector.load %arg1[%c0_55, %c0_56, %c74] : memref<1x8x640xf32, #tpu.memory_space<vmem>>, vector<1x8x512xf32>
    %52 = vector.shape_cast %51 : vector<1x8x512xf32> to vector<8x512xf32>
    %c136 = arith.constant 136 : index
    %c0_57 = arith.constant 0 : index
    %53 = vector.load %arg5[%c136, %c0_57] : memref<200x512xf32, #tpu.memory_space<vmem>>, vector<8x512xf32>
    tpu.vector_store %arg5[%c136, %c0_57], %52 {strides = array<i32>} : memref<200x512xf32, #tpu.memory_space<vmem>>, vector<8x512xf32>,
    %c0_58 = arith.constant 0 : index
    %c0_59 = arith.constant 0 : index
    %c75 = arith.constant 75 : index
    %54 = vector.load %arg1[%c0_58, %c0_59, %c75] : memref<1x8x640xf32, #tpu.memory_space<vmem>>, vector<1x8x512xf32>
    %55 = vector.shape_cast %54 : vector<1x8x512xf32> to vector<8x512xf32>
    %c144 = arith.constant 144 : index
    %c0_60 = arith.constant 0 : index
    %56 = vector.load %arg5[%c144, %c0_60] : memref<200x512xf32, #tpu.memory_space<vmem>>, vector<8x512xf32>
    tpu.vector_store %arg5[%c144, %c0_60], %55 {strides = array<i32>} : memref<200x512xf32, #tpu.memory_space<vmem>>, vector<8x512xf32>,
    %c0_61 = arith.constant 0 : index
    %c0_62 = arith.constant 0 : index
    %c76 = arith.constant 76 : index
    %57 = vector.load %arg1[%c0_61, %c0_62, %c76] : memref<1x8x640xf32, #tpu.memory_space<vmem>>, vector<1x8x512xf32>
    %58 = vector.shape_cast %57 : vector<1x8x512xf32> to vector<8x512xf32>
    %c152 = arith.constant 152 : index
    %c0_63 = arith.constant 0 : index
    %59 = vector.load %arg5[%c152, %c0_63] : memref<200x512xf32, #tpu.memory_space<vmem>>, vector<8x512xf32>
    tpu.vector_store %arg5[%c152, %c0_63], %58 {strides = array<i32>} : memref<200x512xf32, #tpu.memory_space<vmem>>, vector<8x512xf32>,
    %c0_64 = arith.constant 0 : index
    %c0_65 = arith.constant 0 : index
    %c96_66 = arith.constant 96 : index
    %60 = vector.load %arg1[%c0_64, %c0_65, %c96_66] : memref<1x8x640xf32, #tpu.memory_space<vmem>>, vector<1x8x512xf32>
    %61 = vector.shape_cast %60 : vector<1x8x512xf32> to vector<8x512xf32>
    %c160 = arith.constant 160 : index
    %c0_67 = arith.constant 0 : index
    %62 = vector.load %arg5[%c160, %c0_67] : memref<200x512xf32, #tpu.memory_space<vmem>>, vector<8x512xf32>
    tpu.vector_store %arg5[%c160, %c0_67], %61 {strides = array<i32>} : memref<200x512xf32, #tpu.memory_space<vmem>>, vector<8x512xf32>,
    %c0_68 = arith.constant 0 : index
    %c0_69 = arith.constant 0 : index
    %c97 = arith.constant 97 : index
    %63 = vector.load %arg1[%c0_68, %c0_69, %c97] : memref<1x8x640xf32, #tpu.memory_space<vmem>>, vector<1x8x512xf32>
    %64 = vector.shape_cast %63 : vector<1x8x512xf32> to vector<8x512xf32>
    %c168 = arith.constant 168 : index
    %c0_70 = arith.constant 0 : index
    %65 = vector.load %arg5[%c168, %c0_70] : memref<200x512xf32, #tpu.memory_space<vmem>>, vector<8x512xf32>
    tpu.vector_store %arg5[%c168, %c0_70], %64 {strides = array<i32>} : memref<200x512xf32, #tpu.memory_space<vmem>>, vector<8x512xf32>,
    %c0_71 = arith.constant 0 : index
    %c0_72 = arith.constant 0 : index
    %c98 = arith.constant 98 : index
    %66 = vector.load %arg1[%c0_71, %c0_72, %c98] : memref<1x8x640xf32, #tpu.memory_space<vmem>>, vector<1x8x512xf32>
    %67 = vector.shape_cast %66 : vector<1x8x512xf32> to vector<8x512xf32>
    %c176 = arith.constant 176 : index
    %c0_73 = arith.constant 0 : index
    %68 = vector.load %arg5[%c176, %c0_73] : memref<200x512xf32, #tpu.memory_space<vmem>>, vector<8x512xf32>
    tpu.vector_store %arg5[%c176, %c0_73], %67 {strides = array<i32>} : memref<200x512xf32, #tpu.memory_space<vmem>>, vector<8x512xf32>,
    %c0_74 = arith.constant 0 : index
    %c0_75 = arith.constant 0 : index
    %c99 = arith.constant 99 : index
    %69 = vector.load %arg1[%c0_74, %c0_75, %c99] : memref<1x8x640xf32, #tpu.memory_space<vmem>>, vector<1x8x512xf32>
    %70 = vector.shape_cast %69 : vector<1x8x512xf32> to vector<8x512xf32>
    %c184 = arith.constant 184 : index
    %c0_76 = arith.constant 0 : index
    %71 = vector.load %arg5[%c184, %c0_76] : memref<200x512xf32, #tpu.memory_space<vmem>>, vector<8x512xf32>
    tpu.vector_store %arg5[%c184, %c0_76], %70 {strides = array<i32>} : memref<200x512xf32, #tpu.memory_space<vmem>>, vector<8x512xf32>,
    %c0_77 = arith.constant 0 : index
    %c0_78 = arith.constant 0 : index
    %c100 = arith.constant 100 : index
    %72 = vector.load %arg1[%c0_77, %c0_78, %c100] : memref<1x8x640xf32, #tpu.memory_space<vmem>>, vector<1x8x512xf32>
    %73 = vector.shape_cast %72 : vector<1x8x512xf32> to vector<8x512xf32>
    %c192 = arith.constant 192 : index
    %c0_79 = arith.constant 0 : index
    %74 = vector.load %arg5[%c192, %c0_79] : memref<200x512xf32, #tpu.memory_space<vmem>>, vector<8x512xf32>
    tpu.vector_store %arg5[%c192, %c0_79], %73 {strides = array<i32>} : memref<200x512xf32, #tpu.memory_space<vmem>>, vector<8x512xf32>,
    %c0_80 = arith.constant 0 : index
    %c0_81 = arith.constant 0 : index
    %75 = vector.load %arg2[%c0_80, %c0_81] : memref<1x200xf32, #tpu.memory_space<vmem>>, vector<1x200xf32>
    %c0_82 = arith.constant 0 : index
    %c0_83 = arith.constant 0 : index
    %76 = vector.load %arg5[%c0_82, %c0_83] : memref<200x512xf32, #tpu.memory_space<vmem>>, vector<200x512xf32>
    %cst = arith.constant dense<0.000000e+00> : vector<1x512xf32>
    %77 = tpu.matmul %75, %76, %cst {dimension_numbers = #tpu.dot_dimension_numbers<[1], [0], [0], [1], [0, 0, 1, 1], [], []>} : vector<1x200xf32>, vector<200x512xf32>, vector<1x512xf32> -> vector<1x512xf32>
    %c0_84 = arith.constant 0 : index
    %c0_85 = arith.constant 0 : index
    %78 = vector.load %arg3[%c0_84, %c0_85] : memref<1x512xf32, #tpu.memory_space<vmem>>, vector<1x512xf32>
    %79 = arith.addf %77, %78 : vector<1x512xf32>
    %c0_86 = arith.constant 0 : index
    %c0_87 = arith.constant 0 : index
    %c0_88 = arith.constant 0 : index
    %80 = vector.load %arg4[%c0_86, %c0_87, %c0_88] : memref<1x1x512xf32, #tpu.memory_space<vmem>>, vector<1x1x512xf32>
    %81 = vector.shape_cast %80 : vector<1x1x512xf32> to vector<1x512xf32>
    %82 = vector.shape_cast %79 : vector<1x512xf32> to vector<1x1x512xf32>
    tpu.vector_store %arg4[%c0_86, %c0_87, %c0_88], %82 {strides = array<i32>} : memref<1x1x512xf32, #tpu.memory_space<vmem>>, vector<1x1x512xf32>,
    return
  }
  func.func @transform_0(%arg0: i32) -> (i32, i32, i32) {
    %c0_i32 = arith.constant 0 : i32
    %c0_i32_0 = arith.constant 0 : i32
    %c0_i32_1 = arith.constant 0 : i32
    return %arg0, %c0_i32, %c0_i32_0 : i32, i32, i32
  }
  func.func @transform_1(%arg0: i32) -> (i32, i32) {
    %c0_i32 = arith.constant 0 : i32
    %c0_i32_0 = arith.constant 0 : i32
    %c0_i32_1 = arith.constant 0 : i32
    return %c0_i32, %c0_i32_0 : i32, i32
  }
  func.func @transform_2(%arg0: i32) -> (i32, i32) {
    %c0_i32 = arith.constant 0 : i32
    %c0_i32_0 = arith.constant 0 : i32
    %c0_i32_1 = arith.constant 0 : i32
    return %c0_i32, %c0_i32_0 : i32, i32
  }
  func.func @transform_3(%arg0: i32) -> (i32, i32, i32) {
    %c0_i32 = arith.constant 0 : i32
    %c0_i32_0 = arith.constant 0 : i32
    %c0_i32_1 = arith.constant 0 : i32
    return %arg0, %c0_i32, %c0_i32_0 : i32, i32, i32
  }
}

</mosaic_0001>

<llo_original>
// kernel: _decoder_pallas.1
$region0: #{_decoder_pallas.1}
  #allocation0 [shape = 'u32[]', space=smem, size = 0x4, offset = 0x4, fixed_abs, tag = 'smem constant byte address 0x4 - core index']
  #allocation1 [shape = 'u32[72,128]{1,0:T(1,128)}', space=vmem, size = 0x9000, scoped, tag = 'internal scratch']
  #allocation2 [shape = 'f32[200,512]{1,0:T(8,128)}', space=vmem, size = 0x64000, scoped, tag = 'scratch operand']
  %s0 = inlined_call_operand.vmem [shape: f32[2,8,640], index: 0, kind: input, shape index: {}]
  %s1 = inlined_call_operand.vmem [shape: f32[1,200], index: 1, kind: input, shape index: {}]
  %s2 = inlined_call_operand.vmem [shape: f32[1,512], index: 2, kind: input, shape index: {}]
  %s3 = inlined_call_operand.vmem [shape: f32[2,1,512], index: 3, kind: output, shape index: {}]
  %s4 = sld [smem:[#allocation0]]
  $region45: #{_decoder_pallas.1} parent=0
    _
  %s6 = ssub.s32 1, %s4
  %s7 = scalar_select 0, %s6, %s4
  loop: start=0, step=1, limit=4
  $region2: #{_decoder_pallas.1} parent=0 // loop_pre_header
    _
  $region3: #{_decoder_pallas.1} parent=0 // loop_header
    %s9 = sphi 0, %s13
    %p10 = scmp.ge.s32.totalorder %s9, 4
    %s19 = sphi 0, %s21
    %s22 = sphi 0, %s19
    %s23 = sphi 0, %s22
    %s39 = sphi 0, %s23
    %s43 = sphi 0, %s43
    %s45 = sphi 0, %s43
    %s46 = sphi 0, %s45
    %s60 = sphi 0, %s46
    %s64 = sphi 0, %s64
    %s66 = sphi 0, %s64
    %s67 = sphi 0, %s66
    %s81 = sphi 0, %s67
    %s87 = sphi 0, %s89
    %s90 = sphi 0, %s87
    %s91 = sphi 0, %s90
    %s107 = sphi 0, %s91
  $region4: #{_decoder_pallas.1} parent=0 // loop_header_branch
    %12 = sbr.rel (%p10) target = $region8
  $region5: #{_decoder_pallas.1} parent=0 // loop_body
    %s14 = ssub.s32 %s9, 1
    %s15 = ssub.s32 %s9, 2
    %s16 = sadd.s32 %s9, 1
    %s17 = ssub.s32 %s9, %s16
    %p18 = scmp.eq.s32.totalorder %s17, 0
    %s20 = sadd.s32 %s19, 1
    %s21 = scalar_select %p18, %s19, %s20
    %p24 = pneg %p18
    %p25 = scmp.eq.s32.totalorder %s9, 1
    %p26 = por %p24, %p25
    %p27 = scmp.ne.s32.totalorder %s19, %s22
    %p28 = scmp.eq.s32.totalorder %s9, 0
    %p29 = por %p27, %p28
    %p30 = scmp.ne.s32.totalorder %s19, %s22
    %p31 = scmp.eq.s32.totalorder %s14, 1
    %p32 = por %p30, %p31
    %p33 = scmp.ne.s32.totalorder %s22, %s23
    %p34 = scmp.eq.s32.totalorder %s14, 0
    %p35 = por %p33, %p34
    %p36 = scmp.ne.s32.totalorder %s22, %s23
    %p37 = scmp.eq.s32.totalorder %s15, 1
    %p38 = por %p36, %p37
    %p40 = scmp.ne.s32.totalorder %s23, %s39
    %p41 = scmp.eq.s32.totalorder %s15, 0
    %p42 = por %p40, %p41
    %s44 = sadd.s32 %s43, 1
    %p47 = scmp.eq.s32.totalorder %s9, 1
    %p48 = scmp.ne.s32.totalorder %s43, %s45
    %p49 = scmp.eq.s32.totalorder %s9, 0
    %p50 = por %p48, %p49
    %p51 = scmp.ne.s32.totalorder %s43, %s45
    %p52 = scmp.eq.s32.totalorder %s14, 1
    %p53 = por %p51, %p52
    %p54 = scmp.ne.s32.totalorder %s45, %s46
    %p55 = scmp.eq.s32.totalorder %s14, 0
    %p56 = por %p54, %p55
    %p57 = scmp.ne.s32.totalorder %s45, %s46
    %p58 = scmp.eq.s32.totalorder %s15, 1
    %p59 = por %p57, %p58
    %p61 = scmp.ne.s32.totalorder %s46, %s60
    %p62 = scmp.eq.s32.totalorder %s15, 0
    %p63 = por %p61, %p62
    %s65 = sadd.s32 %s64, 1
    %p68 = scmp.eq.s32.totalorder %s9, 1
    %p69 = scmp.ne.s32.totalorder %s64, %s66
    %p70 = scmp.eq.s32.totalorder %s9, 0
    %p71 = por %p69, %p70
    %p72 = scmp.ne.s32.totalorder %s64, %s66
    %p73 = scmp.eq.s32.totalorder %s14, 1
    %p74 = por %p72, %p73
    %p75 = scmp.ne.s32.totalorder %s66, %s67
    %p76 = scmp.eq.s32.totalorder %s14, 0
    %p77 = por %p75, %p76
    %p78 = scmp.ne.s32.totalorder %s66, %s67
    %p79 = scmp.eq.s32.totalorder %s15, 1
    %p80 = por %p78, %p79
    %p82 = scmp.ne.s32.totalorder %s67, %s81
    %p83 = scmp.eq.s32.totalorder %s15, 0
    %p84 = por %p82, %p83
    %s85 = ssub.s32 %s9, %s16
    %p86 = scmp.eq.s32.totalorder %s85, 0
    %s88 = sadd.s32 %s87, 1
    %s89 = scalar_select %p86, %s87, %s88
    %p92 = pneg %p86
    %p93 = scmp.eq.s32.totalorder %s9, 1
    %p94 = por %p92, %p93
    %p95 = scmp.ne.s32.totalorder %s87, %s90
    %p96 = scmp.eq.s32.totalorder %s9, 0
    %p97 = por %p95, %p96
    %p98 = scmp.ne.s32.totalorder %s87, %s90
    %p99 = scmp.eq.s32.totalorder %s14, 1
    %p100 = por %p98, %p99
    %p101 = scmp.ne.s32.totalorder %s90, %s91
    %p102 = scmp.eq.s32.totalorder %s14, 0
    %p103 = por %p101, %p102
    %p104 = scmp.ne.s32.totalorder %s90, %s91
    %p105 = scmp.eq.s32.totalorder %s15, 1
    %p106 = por %p104, %p105
    %p108 = scmp.ne.s32.totalorder %s91, %s107
    %p109 = scmp.eq.s32.totalorder %s15, 0
    %p110 = por %p108, %p109
    %p111 = scmp.le.s32.totalorder 1, %s9
    %p112 = scmp.lt.s32.totalorder %s9, 3
    %p113 = pnand %p111, %p112
    %p114 = pneg %p113
    // Predicated region
    $region9: #{_decoder_pallas.1} parent=5 // pred_check
      _
    $region10: #{_decoder_pallas.1} parent=5 // pred_check_branch
      %116 = sbr.rel (%p113) target = $region12
    $region11: #{_decoder_pallas.1} parent=5 // pred_region
      %s117 = ssub.s32 %s9, 1
      // Predicated region
      $region13: #{_decoder_pallas.1} parent=11 // pred_check
        %p118 = pneg %p56
      $region14: #{_decoder_pallas.1} parent=11 // pred_check_branch
        %120 = sbr.rel (%p118) target = $region16
      $region15: #{_decoder_pallas.1} parent=11 // pred_region
        _
      $region16: #{_decoder_pallas.1} parent=11 // pred_fallthru
        _
      // Predicated region
      $region17: #{_decoder_pallas.1} parent=11 // pred_check
        %p121 = pneg %p77
      $region18: #{_decoder_pallas.1} parent=11 // pred_check_branch
        %123 = sbr.rel (%p121) target = $region20
      $region19: #{_decoder_pallas.1} parent=11 // pred_region
        _
      $region20: #{_decoder_pallas.1} parent=11 // pred_fallthru
        _
    $region12: #{_decoder_pallas.1} parent=5 // pred_fallthru
      _
    %p124 = scmp.lt.s32.totalorder %s9, 2
    // Predicated region
    $region21: #{_decoder_pallas.1} parent=5 // pred_check
      %p125 = pneg %p124
    $region22: #{_decoder_pallas.1} parent=5 // pred_check_branch
      %127 = sbr.rel (%p125) target = $region24
    $region23: #{_decoder_pallas.1} parent=5 // pred_region
      // Predicated region
      $region25: #{_decoder_pallas.1} parent=23 // pred_check
        %p128 = pneg %p29
      $region26: #{_decoder_pallas.1} parent=23 // pred_check_branch
        %130 = sbr.rel (%p128) target = $region28
      $region27: #{_decoder_pallas.1} parent=23 // pred_region
        %p131 = scmp.lt.s32.totalorder %s9, 1
        %s132 = scalar_select %p131, %s9, 1
        %s133 = smul.addr %s132, 5
        %s134 = smul.addr %s133, 8
        %s135 = scalar_lea.vmem %s0, %s134
      $region28: #{_decoder_pallas.1} parent=23 // pred_fallthru
        _
    $region24: #{_decoder_pallas.1} parent=5 // pred_fallthru
      _
    %p136 = scmp.le.s32.totalorder 1, %s9
    %p137 = scmp.lt.s32.totalorder %s9, 3
    %p138 = pnand %p136, %p137
    %p139 = pneg %p138
    // Predicated region
    $region29: #{_decoder_pallas.1} parent=5 // pred_check
      _
    $region30: #{_decoder_pallas.1} parent=5 // pred_check_branch
      %141 = sbr.rel (%p138) target = $region32
    $region31: #{_decoder_pallas.1} parent=5 // pred_region
      %s142 = ssub.s32 %s9, 1
      %p143 = scmp.lt.s32.totalorder %s14, 1
      %s144 = scalar_select %p143, %s14, 1
      %s145 = smul.addr %s144, 5
      %s146 = smul.addr %s145, 8
      %s147 = scalar_lea.vmem %s0, %s146
      %p148 = pneg %p35
      %p149 = pneg %p32
      %p150 = pneg %p56
      %p151 = pneg %p53
      %p152 = pneg %p77
      %p153 = pneg %p74
      %p154 = pneg %p103
      %p155 = pneg %p100
      %p156 = scmp.lt.s32.totalorder %s14, 1
      %s157 = scalar_select %p156, %s14, 1
      %s158 = smul.addr %s157, 4
      %s159 = scalar_lea.vmem %s3, %s158
      %p160 = scmp.lt.s32.totalorder %s14, 1
      %s161 = scalar_select %p160, %s14, 1
      %s162 = smul.addr %s161, 5
      %s163 = smul.addr %s162, 8
      %s164 = scalar_lea.vmem %s0, %s163
      %p165 = scmp.lt.s32.totalorder %s14, 1
      %s166 = scalar_select %p165, %s14, 1
      %s167 = smul.addr %s166, 4
      %s168 = scalar_lea.vmem %s3, %s167
      %v169 = vld [vmem:[%s164] sm:$0xff]
      %v170 = vld [vmem:[%s164 + $0x8] sm:$0xff]
      %v171 = vld [vmem:[%s164 + $0x10] sm:$0xff]
      %v172 = vld [vmem:[%s164 + $0x18] sm:$0xff]
      %173 = vst [vmem:[#allocation2] sm:$0xff] %v169
      %174 = vst [vmem:[#allocation2 + $0x8] sm:$0xff] %v170
      %175 = vst [vmem:[#allocation2 + $0x10] sm:$0xff] %v171
      %176 = vst [vmem:[#allocation2 + $0x18] sm:$0xff] %v172
      %v177 = vld [vmem:[%s164] sm:$0xff]
      %v178 = vld [vmem:[%s164 + $0x8] sm:$0xff]
      %v179 = vld [vmem:[%s164 + $0x10] sm:$0xff]
      %v180 = vld [vmem:[%s164 + $0x18] sm:$0xff]
      %v181 = vld [vmem:[%s164 + $0x20] sm:$0xff]
      %187 = vrot.lane.b32.xlu0 %v177, 127
      %v188 = vpop.permute.xlu0 %187
      %189 = vrot.lane.b32.xlu0 %v178, 127
      %v190 = vpop.permute.xlu0 %189
      %191 = vrot.lane.b32.xlu0 %v179, 127
      %v192 = vpop.permute.xlu0 %191
      %193 = vrot.lane.b32.xlu0 %v180, 127
      %v194 = vpop.permute.xlu0 %193
      %195 = vrot.lane.b32.xlu0 %v181, 127
      %v196 = vpop.permute.xlu0 %195
      %vm197 = vcmask 1039360
      %v198 = vsel %vm197, %v188, %v190
      %v199 = vsel %vm197, %v190, %v192
      %v200 = vsel %vm197, %v192, %v194
      %v201 = vsel %vm197, %v194, %v196
      %206 = vst [vmem:[#allocation2 + $0x20] sm:$0xff] %v198
      %207 = vst [vmem:[#allocation2 + $0x28] sm:$0xff] %v199
      %208 = vst [vmem:[#allocation2 + $0x30] sm:$0xff] %v200
      %209 = vst [vmem:[#allocation2 + $0x38] sm:$0xff] %v201
      %v210 = vld [vmem:[%s164] sm:$0xff]
      %v211 = vld [vmem:[%s164 + $0x8] sm:$0xff]
      %v212 = vld [vmem:[%s164 + $0x10] sm:$0xff]
      %v213 = vld [vmem:[%s164 + $0x18] sm:$0xff]
      %v214 = vld [vmem:[%s164 + $0x20] sm:$0xff]
      %220 = vrot.lane.b32.xlu0 %v210, 126
      %v221 = vpop.permute.xlu0 %220
      %222 = vrot.lane.b32.xlu0 %v211, 126
      %v223 = vpop.permute.xlu0 %222
      %224 = vrot.lane.b32.xlu0 %v212, 126
      %v225 = vpop.permute.xlu0 %224
      %226 = vrot.lane.b32.xlu0 %v213, 126
      %v227 = vpop.permute.xlu0 %226
      %228 = vrot.lane.b32.xlu0 %v214, 126
      %v229 = vpop.permute.xlu0 %228
      %vm230 = vcmask 1031168
      %v231 = vsel %vm230, %v221, %v223
      %v232 = vsel %vm230, %v223, %v225
      %v233 = vsel %vm230, %v225, %v227
      %v234 = vsel %vm230, %v227, %v229
      %239 = vst [vmem:[#allocation2 + $0x40] sm:$0xff] %v231
      %240 = vst [vmem:[#allocation2 + $0x48] sm:$0xff] %v232
      %241 = vst [vmem:[#allocation2 + $0x50] sm:$0xff] %v233
      %242 = vst [vmem:[#allocation2 + $0x58] sm:$0xff] %v234
      %v243 = vld [vmem:[%s164] sm:$0xff]
      %v244 = vld [vmem:[%s164 + $0x8] sm:$0xff]
      %v245 = vld [vmem:[%s164 + $0x10] sm:$0xff]
      %v246 = vld [vmem:[%s164 + $0x18] sm:$0xff]
      %v247 = vld [vmem:[%s164 + $0x20] sm:$0xff]
      %253 = vrot.lane.b32.xlu0 %v243, 125
      %v254 = vpop.permute.xlu0 %253
      %255 = vrot.lane.b32.xlu0 %v244, 125
      %v256 = vpop.permute.xlu0 %255
      %257 = vrot.lane.b32.xlu0 %v245, 125
      %v258 = vpop.permute.xlu0 %257
      %259 = vrot.lane.b32.xlu0 %v246, 125
      %v260 = vpop.permute.xlu0 %259
      %261 = vrot.lane.b32.xlu0 %v247, 125
      %v262 = vpop.permute.xlu0 %261
      %vm263 = vcmask 1022976
      %v264 = vsel %vm263, %v254, %v256
      %v265 = vsel %vm263, %v256, %v258
      %v266 = vsel %vm263, %v258, %v260
      %v267 = vsel %vm263, %v260, %v262
      %272 = vst [vmem:[#allocation2 + $0x60] sm:$0xff] %v264
      %273 = vst [vmem:[#allocation2 + $0x68] sm:$0xff] %v265
      %274 = vst [vmem:[#allocation2 + $0x70] sm:$0xff] %v266
      %275 = vst [vmem:[#allocation2 + $0x78] sm:$0xff] %v267
      %v276 = vld [vmem:[%s164] sm:$0xff]
      %v277 = vld [vmem:[%s164 + $0x8] sm:$0xff]
      %v278 = vld [vmem:[%s164 + $0x10] sm:$0xff]
      %v279 = vld [vmem:[%s164 + $0x18] sm:$0xff]
      %v280 = vld [vmem:[%s164 + $0x20] sm:$0xff]
      %286 = vrot.lane.b32.xlu0 %v276, 124
      %v287 = vpop.permute.xlu0 %286
      %288 = vrot.lane.b32.xlu0 %v277, 124
      %v289 = vpop.permute.xlu0 %288
      %290 = vrot.lane.b32.xlu0 %v278, 124
      %v291 = vpop.permute.xlu0 %290
      %292 = vrot.lane.b32.xlu0 %v279, 124
      %v293 = vpop.permute.xlu0 %292
      %294 = vrot.lane.b32.xlu0 %v280, 124
      %v295 = vpop.permute.xlu0 %294
      %vm296 = vcmask 1014784
      %v297 = vsel %vm296, %v287, %v289
      %v298 = vsel %vm296, %v289, %v291
      %v299 = vsel %vm296, %v291, %v293
      %v300 = vsel %vm296, %v293, %v295
      %305 = vst [vmem:[#allocation2 + $0x80] sm:$0xff] %v297
      %306 = vst [vmem:[#allocation2 + $0x88] sm:$0xff] %v298
      %307 = vst [vmem:[#allocation2 + $0x90] sm:$0xff] %v299
      %308 = vst [vmem:[#allocation2 + $0x98] sm:$0xff] %v300
      %v309 = vld [vmem:[%s164] sm:$0xff]
      %v310 = vld [vmem:[%s164 + $0x8] sm:$0xff]
      %v311 = vld [vmem:[%s164 + $0x10] sm:$0xff]
      %v312 = vld [vmem:[%s164 + $0x18] sm:$0xff]
      %v313 = vld [vmem:[%s164 + $0x20] sm:$0xff]
      %319 = vrot.lane.b32.xlu0 %v309, 104
      %v320 = vpop.permute.xlu0 %319
      %321 = vrot.lane.b32.xlu0 %v310, 104
      %v322 = vpop.permute.xlu0 %321
      %323 = vrot.lane.b32.xlu0 %v311, 104
      %v324 = vpop.permute.xlu0 %323
      %325 = vrot.lane.b32.xlu0 %v312, 104
      %v326 = vpop.permute.xlu0 %325
      %327 = vrot.lane.b32.xlu0 %v313, 104
      %v328 = vpop.permute.xlu0 %327
      %vm329 = vcmask 850944
      %v330 = vsel %vm329, %v320, %v322
      %v331 = vsel %vm329, %v322, %v324
      %v332 = vsel %vm329, %v324, %v326
      %v333 = vsel %vm329, %v326, %v328
      %338 = vst [vmem:[#allocation2 + $0xa0] sm:$0xff] %v330
      %339 = vst [vmem:[#allocation2 + $0xa8] sm:$0xff] %v331
      %340 = vst [vmem:[#allocation2 + $0xb0] sm:$0xff] %v332
      %341 = vst [vmem:[#allocation2 + $0xb8] sm:$0xff] %v333
      %v342 = vld [vmem:[%s164] sm:$0xff]
      %v343 = vld [vmem:[%s164 + $0x8] sm:$0xff]
      %v344 = vld [vmem:[%s164 + $0x10] sm:$0xff]
      %v345 = vld [vmem:[%s164 + $0x18] sm:$0xff]
      %v346 = vld [vmem:[%s164 + $0x20] sm:$0xff]
      %352 = vrot.lane.b32.xlu0 %v342, 103
      %v353 = vpop.permute.xlu0 %352
      %354 = vrot.lane.b32.xlu0 %v343, 103
      %v355 = vpop.permute.xlu0 %354
      %356 = vrot.lane.b32.xlu0 %v344, 103
      %v357 = vpop.permute.xlu0 %356
      %358 = vrot.lane.b32.xlu0 %v345, 103
      %v359 = vpop.permute.xlu0 %358
      %360 = vrot.lane.b32.xlu0 %v346, 103
      %v361 = vpop.permute.xlu0 %360
      %vm362 = vcmask 842752
      %v363 = vsel %vm362, %v353, %v355
      %v364 = vsel %vm362, %v355, %v357
      %v365 = vsel %vm362, %v357, %v359
      %v366 = vsel %vm362, %v359, %v361
      %371 = vst [vmem:[#allocation2 + $0xc0] sm:$0xff] %v363
      %372 = vst [vmem:[#allocation2 + $0xc8] sm:$0xff] %v364
      %373 = vst [vmem:[#allocation2 + $0xd0] sm:$0xff] %v365
      %374 = vst [vmem:[#allocation2 + $0xd8] sm:$0xff] %v366
      %v375 = vld [vmem:[%s164] sm:$0xff]
      %v376 = vld [vmem:[%s164 + $0x8] sm:$0xff]
      %v377 = vld [vmem:[%s164 + $0x10] sm:$0xff]
      %v378 = vld [vmem:[%s164 + $0x18] sm:$0xff]
      %v379 = vld [vmem:[%s164 + $0x20] sm:$0xff]
      %385 = vrot.lane.b32.xlu0 %v375, 102
      %v386 = vpop.permute.xlu0 %385
      %387 = vrot.lane.b32.xlu0 %v376, 102
      %v388 = vpop.permute.xlu0 %387
      %389 = vrot.lane.b32.xlu0 %v377, 102
      %v390 = vpop.permute.xlu0 %389
      %391 = vrot.lane.b32.xlu0 %v378, 102
      %v392 = vpop.permute.xlu0 %391
      %393 = vrot.lane.b32.xlu0 %v379, 102
      %v394 = vpop.permute.xlu0 %393
      %vm395 = vcmask 834560
      %v396 = vsel %vm395, %v386, %v388
      %v397 = vsel %vm395, %v388, %v390
      %v398 = vsel %vm395, %v390, %v392
      %v399 = vsel %vm395, %v392, %v394
      %404 = vst [vmem:[#allocation2 + $0xe0] sm:$0xff] %v396
      %405 = vst [vmem:[#allocation2 + $0xe8] sm:$0xff] %v397
      %406 = vst [vmem:[#allocation2 + $0xf0] sm:$0xff] %v398
      %407 = vst [vmem:[#allocation2 + $0xf8] sm:$0xff] %v399
      %v408 = vld [vmem:[%s164] sm:$0xff]
      %v409 = vld [vmem:[%s164 + $0x8] sm:$0xff]
      %v410 = vld [vmem:[%s164 + $0x10] sm:$0xff]
      %v411 = vld [vmem:[%s164 + $0x18] sm:$0xff]
      %v412 = vld [vmem:[%s164 + $0x20] sm:$0xff]
      %418 = vrot.lane.b32.xlu0 %v408, 101
      %v419 = vpop.permute.xlu0 %418
      %420 = vrot.lane.b32.xlu0 %v409, 101
      %v421 = vpop.permute.xlu0 %420
      %422 = vrot.lane.b32.xlu0 %v410, 101
      %v423 = vpop.permute.xlu0 %422
      %424 = vrot.lane.b32.xlu0 %v411, 101
      %v425 = vpop.permute.xlu0 %424
      %426 = vrot.lane.b32.xlu0 %v412, 101
      %v427 = vpop.permute.xlu0 %426
      %vm428 = vcmask 826368
      %v429 = vsel %vm428, %v419, %v421
      %v430 = vsel %vm428, %v421, %v423
      %v431 = vsel %vm428, %v423, %v425
      %v432 = vsel %vm428, %v425, %v427
      %437 = vst [vmem:[#allocation2 + $0x100] sm:$0xff] %v429
      %438 = vst [vmem:[#allocation2 + $0x108] sm:$0xff] %v430
      %439 = vst [vmem:[#allocation2 + $0x110] sm:$0xff] %v431
      %440 = vst [vmem:[#allocation2 + $0x118] sm:$0xff] %v432
      %v441 = vld [vmem:[%s164] sm:$0xff]
      %v442 = vld [vmem:[%s164 + $0x8] sm:$0xff]
      %v443 = vld [vmem:[%s164 + $0x10] sm:$0xff]
      %v444 = vld [vmem:[%s164 + $0x18] sm:$0xff]
      %v445 = vld [vmem:[%s164 + $0x20] sm:$0xff]
      %451 = vrot.lane.b32.xlu0 %v441, 100
      %v452 = vpop.permute.xlu0 %451
      %453 = vrot.lane.b32.xlu0 %v442, 100
      %v454 = vpop.permute.xlu0 %453
      %455 = vrot.lane.b32.xlu0 %v443, 100
      %v456 = vpop.permute.xlu0 %455
      %457 = vrot.lane.b32.xlu0 %v444, 100
      %v458 = vpop.permute.xlu0 %457
      %459 = vrot.lane.b32.xlu0 %v445, 100
      %v460 = vpop.permute.xlu0 %459
      %vm461 = vcmask 818176
      %v462 = vsel %vm461, %v452, %v454
      %v463 = vsel %vm461, %v454, %v456
      %v464 = vsel %vm461, %v456, %v458
      %v465 = vsel %vm461, %v458, %v460
      %470 = vst [vmem:[#allocation2 + $0x120] sm:$0xff] %v462
      %471 = vst [vmem:[#allocation2 + $0x128] sm:$0xff] %v463
      %472 = vst [vmem:[#allocation2 + $0x130] sm:$0xff] %v464
      %473 = vst [vmem:[#allocation2 + $0x138] sm:$0xff] %v465
      %v474 = vld [vmem:[%s164] sm:$0xff]
      %v475 = vld [vmem:[%s164 + $0x8] sm:$0xff]
      %v476 = vld [vmem:[%s164 + $0x10] sm:$0xff]
      %v477 = vld [vmem:[%s164 + $0x18] sm:$0xff]
      %v478 = vld [vmem:[%s164 + $0x20] sm:$0xff]
      %484 = vrot.lane.b32.xlu0 %v474, 80
      %v485 = vpop.permute.xlu0 %484
      %486 = vrot.lane.b32.xlu0 %v475, 80
      %v487 = vpop.permute.xlu0 %486
      %488 = vrot.lane.b32.xlu0 %v476, 80
      %v489 = vpop.permute.xlu0 %488
      %490 = vrot.lane.b32.xlu0 %v477, 80
      %v491 = vpop.permute.xlu0 %490
      %492 = vrot.lane.b32.xlu0 %v478, 80
      %v493 = vpop.permute.xlu0 %492
      %vm494 = vcmask 654336
      %v495 = vsel %vm494, %v485, %v487
      %v496 = vsel %vm494, %v487, %v489
      %v497 = vsel %vm494, %v489, %v491
      %v498 = vsel %vm494, %v491, %v493
      %503 = vst [vmem:[#allocation2 + $0x140] sm:$0xff] %v495
      %504 = vst [vmem:[#allocation2 + $0x148] sm:$0xff] %v496
      %505 = vst [vmem:[#allocation2 + $0x150] sm:$0xff] %v497
      %506 = vst [vmem:[#allocation2 + $0x158] sm:$0xff] %v498
      %v507 = vld [vmem:[%s164] sm:$0xff]
      %v508 = vld [vmem:[%s164 + $0x8] sm:$0xff]
      %v509 = vld [vmem:[%s164 + $0x10] sm:$0xff]
      %v510 = vld [vmem:[%s164 + $0x18] sm:$0xff]
      %v511 = vld [vmem:[%s164 + $0x20] sm:$0xff]
      %517 = vrot.lane.b32.xlu0 %v507, 79
      %v518 = vpop.permute.xlu0 %517
      %519 = vrot.lane.b32.xlu0 %v508, 79
      %v520 = vpop.permute.xlu0 %519
      %521 = vrot.lane.b32.xlu0 %v509, 79
      %v522 = vpop.permute.xlu0 %521
      %523 = vrot.lane.b32.xlu0 %v510, 79
      %v524 = vpop.permute.xlu0 %523
      %525 = vrot.lane.b32.xlu0 %v511, 79
      %v526 = vpop.permute.xlu0 %525
      %vm527 = vcmask 646144
      %v528 = vsel %vm527, %v518, %v520
      %v529 = vsel %vm527, %v520, %v522
      %v530 = vsel %vm527, %v522, %v524
      %v531 = vsel %vm527, %v524, %v526
      %536 = vst [vmem:[#allocation2 + $0x160] sm:$0xff] %v528
      %537 = vst [vmem:[#allocation2 + $0x168] sm:$0xff] %v529
      %538 = vst [vmem:[#allocation2 + $0x170] sm:$0xff] %v530
      %539 = vst [vmem:[#allocation2 + $0x178] sm:$0xff] %v531
      %v540 = vld [vmem:[%s164] sm:$0xff]
      %v541 = vld [vmem:[%s164 + $0x8] sm:$0xff]
      %v542 = vld [vmem:[%s164 + $0x10] sm:$0xff]
      %v543 = vld [vmem:[%s164 + $0x18] sm:$0xff]
      %v544 = vld [vmem:[%s164 + $0x20] sm:$0xff]
      %550 = vrot.lane.b32.xlu0 %v540, 78
      %v551 = vpop.permute.xlu0 %550
      %552 = vrot.lane.b32.xlu0 %v541, 78
      %v553 = vpop.permute.xlu0 %552
      %554 = vrot.lane.b32.xlu0 %v542, 78
      %v555 = vpop.permute.xlu0 %554
      %556 = vrot.lane.b32.xlu0 %v543, 78
      %v557 = vpop.permute.xlu0 %556
      %558 = vrot.lane.b32.xlu0 %v544, 78
      %v559 = vpop.permute.xlu0 %558
      %vm560 = vcmask 637952
      %v561 = vsel %vm560, %v551, %v553
      %v562 = vsel %vm560, %v553, %v555
      %v563 = vsel %vm560, %v555, %v557
      %v564 = vsel %vm560, %v557, %v559
      %569 = vst [vmem:[#allocation2 + $0x180] sm:$0xff] %v561
      %570 = vst [vmem:[#allocation2 + $0x188] sm:$0xff] %v562
      %571 = vst [vmem:[#allocation2 + $0x190] sm:$0xff] %v563
      %572 = vst [vmem:[#allocation2 + $0x198] sm:$0xff] %v564
      %v573 = vld [vmem:[%s164] sm:$0xff]
      %v574 = vld [vmem:[%s164 + $0x8] sm:$0xff]
      %v575 = vld [vmem:[%s164 + $0x10] sm:$0xff]
      %v576 = vld [vmem:[%s164 + $0x18] sm:$0xff]
      %v577 = vld [vmem:[%s164 + $0x20] sm:$0xff]
      %583 = vrot.lane.b32.xlu0 %v573, 77
      %v584 = vpop.permute.xlu0 %583
      %585 = vrot.lane.b32.xlu0 %v574, 77
      %v586 = vpop.permute.xlu0 %585
      %587 = vrot.lane.b32.xlu0 %v575, 77
      %v588 = vpop.permute.xlu0 %587
      %589 = vrot.lane.b32.xlu0 %v576, 77
      %v590 = vpop.permute.xlu0 %589
      %591 = vrot.lane.b32.xlu0 %v577, 77
      %v592 = vpop.permute.xlu0 %591
      %vm593 = vcmask 629760
      %v594 = vsel %vm593, %v584, %v586
      %v595 = vsel %vm593, %v586, %v588
      %v596 = vsel %vm593, %v588, %v590
      %v597 = vsel %vm593, %v590, %v592
      %602 = vst [vmem:[#allocation2 + $0x1a0] sm:$0xff] %v594
      %603 = vst [vmem:[#allocation2 + $0x1a8] sm:$0xff] %v595
      %604 = vst [vmem:[#allocation2 + $0x1b0] sm:$0xff] %v596
      %605 = vst [vmem:[#allocation2 + $0x1b8] sm:$0xff] %v597
      %v606 = vld [vmem:[%s164] sm:$0xff]
      %v607 = vld [vmem:[%s164 + $0x8] sm:$0xff]
      %v608 = vld [vmem:[%s164 + $0x10] sm:$0xff]
      %v609 = vld [vmem:[%s164 + $0x18] sm:$0xff]
      %v610 = vld [vmem:[%s164 + $0x20] sm:$0xff]
      %616 = vrot.lane.b32.xlu0 %v606, 76
      %v617 = vpop.permute.xlu0 %616
      %618 = vrot.lane.b32.xlu0 %v607, 76
      %v619 = vpop.permute.xlu0 %618
      %620 = vrot.lane.b32.xlu0 %v608, 76
      %v621 = vpop.permute.xlu0 %620
      %622 = vrot.lane.b32.xlu0 %v609, 76
      %v623 = vpop.permute.xlu0 %622
      %624 = vrot.lane.b32.xlu0 %v610, 76
      %v625 = vpop.permute.xlu0 %624
      %vm626 = vcmask 621568
      %v627 = vsel %vm626, %v617, %v619
      %v628 = vsel %vm626, %v619, %v621
      %v629 = vsel %vm626, %v621, %v623
      %v630 = vsel %vm626, %v623, %v625
      %635 = vst [vmem:[#allocation2 + $0x1c0] sm:$0xff] %v627
      %636 = vst [vmem:[#allocation2 + $0x1c8] sm:$0xff] %v628
      %637 = vst [vmem:[#allocation2 + $0x1d0] sm:$0xff] %v629
      %638 = vst [vmem:[#allocation2 + $0x1d8] sm:$0xff] %v630
      %v639 = vld [vmem:[%s164] sm:$0xff]
      %v640 = vld [vmem:[%s164 + $0x8] sm:$0xff]
      %v641 = vld [vmem:[%s164 + $0x10] sm:$0xff]
      %v642 = vld [vmem:[%s164 + $0x18] sm:$0xff]
      %v643 = vld [vmem:[%s164 + $0x20] sm:$0xff]
      %649 = vrot.lane.b32.xlu0 %v639, 56
      %v650 = vpop.permute.xlu0 %649
      %651 = vrot.lane.b32.xlu0 %v640, 56
      %v652 = vpop.permute.xlu0 %651
      %653 = vrot.lane.b32.xlu0 %v641, 56
      %v654 = vpop.permute.xlu0 %653
      %655 = vrot.lane.b32.xlu0 %v642, 56
      %v656 = vpop.permute.xlu0 %655
      %657 = vrot.lane.b32.xlu0 %v643, 56
      %v658 = vpop.permute.xlu0 %657
      %vm659 = vcmask 457728
      %v660 = vsel %vm659, %v650, %v652
      %v661 = vsel %vm659, %v652, %v654
      %v662 = vsel %vm659, %v654, %v656
      %v663 = vsel %vm659, %v656, %v658
      %668 = vst [vmem:[#allocation2 + $0x1e0] sm:$0xff] %v660
      %669 = vst [vmem:[#allocation2 + $0x1e8] sm:$0xff] %v661
      %670 = vst [vmem:[#allocation2 + $0x1f0] sm:$0xff] %v662
      %671 = vst [vmem:[#allocation2 + $0x1f8] sm:$0xff] %v663
      %v672 = vld [vmem:[%s164] sm:$0xff]
      %v673 = vld [vmem:[%s164 + $0x8] sm:$0xff]
      %v674 = vld [vmem:[%s164 + $0x10] sm:$0xff]
      %v675 = vld [vmem:[%s164 + $0x18] sm:$0xff]
      %v676 = vld [vmem:[%s164 + $0x20] sm:$0xff]
      %682 = vrot.lane.b32.xlu0 %v672, 55
      %v683 = vpop.permute.xlu0 %682
      %684 = vrot.lane.b32.xlu0 %v673, 55
      %v685 = vpop.permute.xlu0 %684
      %686 = vrot.lane.b32.xlu0 %v674, 55
      %v687 = vpop.permute.xlu0 %686
      %688 = vrot.lane.b32.xlu0 %v675, 55
      %v689 = vpop.permute.xlu0 %688
      %690 = vrot.lane.b32.xlu0 %v676, 55
      %v691 = vpop.permute.xlu0 %690
      %vm692 = vcmask 449536
      %v693 = vsel %vm692, %v683, %v685
      %v694 = vsel %vm692, %v685, %v687
      %v695 = vsel %vm692, %v687, %v689
      %v696 = vsel %vm692, %v689, %v691
      %701 = vst [vmem:[#allocation2 + $0x200] sm:$0xff] %v693
      %702 = vst [vmem:[#allocation2 + $0x208] sm:$0xff] %v694
      %703 = vst [vmem:[#allocation2 + $0x210] sm:$0xff] %v695
      %704 = vst [vmem:[#allocation2 + $0x218] sm:$0xff] %v696
      %v705 = vld [vmem:[%s164] sm:$0xff]
      %v706 = vld [vmem:[%s164 + $0x8] sm:$0xff]
      %v707 = vld [vmem:[%s164 + $0x10] sm:$0xff]
      %v708 = vld [vmem:[%s164 + $0x18] sm:$0xff]
      %v709 = vld [vmem:[%s164 + $0x20] sm:$0xff]
      %715 = vrot.lane.b32.xlu0 %v705, 54
      %v716 = vpop.permute.xlu0 %715
      %717 = vrot.lane.b32.xlu0 %v706, 54
      %v718 = vpop.permute.xlu0 %717
      %719 = vrot.lane.b32.xlu0 %v707, 54
      %v720 = vpop.permute.xlu0 %719
      %721 = vrot.lane.b32.xlu0 %v708, 54
      %v722 = vpop.permute.xlu0 %721
      %723 = vrot.lane.b32.xlu0 %v709, 54
      %v724 = vpop.permute.xlu0 %723
      %vm725 = vcmask 441344
      %v726 = vsel %vm725, %v716, %v718
      %v727 = vsel %vm725, %v718, %v720
      %v728 = vsel %vm725, %v720, %v722
      %v729 = vsel %vm725, %v722, %v724
      %734 = vst [vmem:[#allocation2 + $0x220] sm:$0xff] %v726
      %735 = vst [vmem:[#allocation2 + $0x228] sm:$0xff] %v727
      %736 = vst [vmem:[#allocation2 + $0x230] sm:$0xff] %v728
      %737 = vst [vmem:[#allocation2 + $0x238] sm:$0xff] %v729
      %v738 = vld [vmem:[%s164] sm:$0xff]
      %v739 = vld [vmem:[%s164 + $0x8] sm:$0xff]
      %v740 = vld [vmem:[%s164 + $0x10] sm:$0xff]
      %v741 = vld [vmem:[%s164 + $0x18] sm:$0xff]
      %v742 = vld [vmem:[%s164 + $0x20] sm:$0xff]
      %748 = vrot.lane.b32.xlu0 %v738, 53
      %v749 = vpop.permute.xlu0 %748
      %750 = vrot.lane.b32.xlu0 %v739, 53
      %v751 = vpop.permute.xlu0 %750
      %752 = vrot.lane.b32.xlu0 %v740, 53
      %v753 = vpop.permute.xlu0 %752
      %754 = vrot.lane.b32.xlu0 %v741, 53
      %v755 = vpop.permute.xlu0 %754
      %756 = vrot.lane.b32.xlu0 %v742, 53
      %v757 = vpop.permute.xlu0 %756
      %vm758 = vcmask 433152
      %v759 = vsel %vm758, %v749, %v751
      %v760 = vsel %vm758, %v751, %v753
      %v761 = vsel %vm758, %v753, %v755
      %v762 = vsel %vm758, %v755, %v757
      %767 = vst [vmem:[#allocation2 + $0x240] sm:$0xff] %v759
      %768 = vst [vmem:[#allocation2 + $0x248] sm:$0xff] %v760
      %769 = vst [vmem:[#allocation2 + $0x250] sm:$0xff] %v761
      %770 = vst [vmem:[#allocation2 + $0x258] sm:$0xff] %v762
      %v771 = vld [vmem:[%s164] sm:$0xff]
      %v772 = vld [vmem:[%s164 + $0x8] sm:$0xff]
      %v773 = vld [vmem:[%s164 + $0x10] sm:$0xff]
      %v774 = vld [vmem:[%s164 + $0x18] sm:$0xff]
      %v775 = vld [vmem:[%s164 + $0x20] sm:$0xff]
      %781 = vrot.lane.b32.xlu0 %v771, 52
      %v782 = vpop.permute.xlu0 %781
      %783 = vrot.lane.b32.xlu0 %v772, 52
      %v784 = vpop.permute.xlu0 %783
      %785 = vrot.lane.b32.xlu0 %v773, 52
      %v786 = vpop.permute.xlu0 %785
      %787 = vrot.lane.b32.xlu0 %v774, 52
      %v788 = vpop.permute.xlu0 %787
      %789 = vrot.lane.b32.xlu0 %v775, 52
      %v790 = vpop.permute.xlu0 %789
      %vm791 = vcmask 424960
      %v792 = vsel %vm791, %v782, %v784
      %v793 = vsel %vm791, %v784, %v786
      %v794 = vsel %vm791, %v786, %v788
      %v795 = vsel %vm791, %v788, %v790
      %800 = vst [vmem:[#allocation2 + $0x260] sm:$0xff] %v792
      %801 = vst [vmem:[#allocation2 + $0x268] sm:$0xff] %v793
      %802 = vst [vmem:[#allocation2 + $0x270] sm:$0xff] %v794
      %803 = vst [vmem:[#allocation2 + $0x278] sm:$0xff] %v795
      %v804 = vld [vmem:[%s164] sm:$0xff]
      %v805 = vld [vmem:[%s164 + $0x8] sm:$0xff]
      %v806 = vld [vmem:[%s164 + $0x10] sm:$0xff]
      %v807 = vld [vmem:[%s164 + $0x18] sm:$0xff]
      %v808 = vld [vmem:[%s164 + $0x20] sm:$0xff]
      %814 = vrot.lane.b32.xlu0 %v804, 32
      %v815 = vpop.permute.xlu0 %814
      %816 = vrot.lane.b32.xlu0 %v805, 32
      %v817 = vpop.permute.xlu0 %816
      %818 = vrot.lane.b32.xlu0 %v806, 32
      %v819 = vpop.permute.xlu0 %818
      %820 = vrot.lane.b32.xlu0 %v807, 32
      %v821 = vpop.permute.xlu0 %820
      %822 = vrot.lane.b32.xlu0 %v808, 32
      %v823 = vpop.permute.xlu0 %822
      %vm824 = vcmask 261120
      %v825 = vsel %vm824, %v815, %v817
      %v826 = vsel %vm824, %v817, %v819
      %v827 = vsel %vm824, %v819, %v821
      %v828 = vsel %vm824, %v821, %v823
      %833 = vst [vmem:[#allocation2 + $0x280] sm:$0xff] %v825
      %834 = vst [vmem:[#allocation2 + $0x288] sm:$0xff] %v826
      %835 = vst [vmem:[#allocation2 + $0x290] sm:$0xff] %v827
      %836 = vst [vmem:[#allocation2 + $0x298] sm:$0xff] %v828
      %v837 = vld [vmem:[%s164] sm:$0xff]
      %v838 = vld [vmem:[%s164 + $0x8] sm:$0xff]
      %v839 = vld [vmem:[%s164 + $0x10] sm:$0xff]
      %v840 = vld [vmem:[%s164 + $0x18] sm:$0xff]
      %v841 = vld [vmem:[%s164 + $0x20] sm:$0xff]
      %847 = vrot.lane.b32.xlu0 %v837, 31
      %v848 = vpop.permute.xlu0 %847
      %849 = vrot.lane.b32.xlu0 %v838, 31
      %v850 = vpop.permute.xlu0 %849
      %851 = vrot.lane.b32.xlu0 %v839, 31
      %v852 = vpop.permute.xlu0 %851
      %853 = vrot.lane.b32.xlu0 %v840, 31
      %v854 = vpop.permute.xlu0 %853
      %855 = vrot.lane.b32.xlu0 %v841, 31
      %v856 = vpop.permute.xlu0 %855
      %vm857 = vcmask 252928
      %v858 = vsel %vm857, %v848, %v850
      %v859 = vsel %vm857, %v850, %v852
      %v860 = vsel %vm857, %v852, %v854
      %v861 = vsel %vm857, %v854, %v856
      %866 = vst [vmem:[#allocation2 + $0x2a0] sm:$0xff] %v858
      %867 = vst [vmem:[#allocation2 + $0x2a8] sm:$0xff] %v859
      %868 = vst [vmem:[#allocation2 + $0x2b0] sm:$0xff] %v860
      %869 = vst [vmem:[#allocation2 + $0x2b8] sm:$0xff] %v861
      %v870 = vld [vmem:[%s164] sm:$0xff]
      %v871 = vld [vmem:[%s164 + $0x8] sm:$0xff]
      %v872 = vld [vmem:[%s164 + $0x10] sm:$0xff]
      %v873 = vld [vmem:[%s164 + $0x18] sm:$0xff]
      %v874 = vld [vmem:[%s164 + $0x20] sm:$0xff]
      %880 = vrot.lane.b32.xlu0 %v870, 30
      %v881 = vpop.permute.xlu0 %880
      %882 = vrot.lane.b32.xlu0 %v871, 30
      %v883 = vpop.permute.xlu0 %882
      %884 = vrot.lane.b32.xlu0 %v872, 30
      %v885 = vpop.permute.xlu0 %884
      %886 = vrot.lane.b32.xlu0 %v873, 30
      %v887 = vpop.permute.xlu0 %886
      %888 = vrot.lane.b32.xlu0 %v874, 30
      %v889 = vpop.permute.xlu0 %888
      %vm890 = vcmask 244736
      %v891 = vsel %vm890, %v881, %v883
      %v892 = vsel %vm890, %v883, %v885
      %v893 = vsel %vm890, %v885, %v887
      %v894 = vsel %vm890, %v887, %v889
      %899 = vst [vmem:[#allocation2 + $0x2c0] sm:$0xff] %v891
      %900 = vst [vmem:[#allocation2 + $0x2c8] sm:$0xff] %v892
      %901 = vst [vmem:[#allocation2 + $0x2d0] sm:$0xff] %v893
      %902 = vst [vmem:[#allocation2 + $0x2d8] sm:$0xff] %v894
      %v903 = vld [vmem:[%s164] sm:$0xff]
      %v904 = vld [vmem:[%s164 + $0x8] sm:$0xff]
      %v905 = vld [vmem:[%s164 + $0x10] sm:$0xff]
      %v906 = vld [vmem:[%s164 + $0x18] sm:$0xff]
      %v907 = vld [vmem:[%s164 + $0x20] sm:$0xff]
      %913 = vrot.lane.b32.xlu0 %v903, 29
      %v914 = vpop.permute.xlu0 %913
      %915 = vrot.lane.b32.xlu0 %v904, 29
      %v916 = vpop.permute.xlu0 %915
      %917 = vrot.lane.b32.xlu0 %v905, 29
      %v918 = vpop.permute.xlu0 %917
      %919 = vrot.lane.b32.xlu0 %v906, 29
      %v920 = vpop.permute.xlu0 %919
      %921 = vrot.lane.b32.xlu0 %v907, 29
      %v922 = vpop.permute.xlu0 %921
      %vm923 = vcmask 236544
      %v924 = vsel %vm923, %v914, %v916
      %v925 = vsel %vm923, %v916, %v918
      %v926 = vsel %vm923, %v918, %v920
      %v927 = vsel %vm923, %v920, %v922
      %932 = vst [vmem:[#allocation2 + $0x2e0] sm:$0xff] %v924
      %933 = vst [vmem:[#allocation2 + $0x2e8] sm:$0xff] %v925
      %934 = vst [vmem:[#allocation2 + $0x2f0] sm:$0xff] %v926
      %935 = vst [vmem:[#allocation2 + $0x2f8] sm:$0xff] %v927
      %v936 = vld [vmem:[%s164] sm:$0xff]
      %v937 = vld [vmem:[%s164 + $0x8] sm:$0xff]
      %v938 = vld [vmem:[%s164 + $0x10] sm:$0xff]
      %v939 = vld [vmem:[%s164 + $0x18] sm:$0xff]
      %v940 = vld [vmem:[%s164 + $0x20] sm:$0xff]
      %946 = vrot.lane.b32.xlu0 %v936, 28
      %v947 = vpop.permute.xlu0 %946
      %948 = vrot.lane.b32.xlu0 %v937, 28
      %v949 = vpop.permute.xlu0 %948
      %950 = vrot.lane.b32.xlu0 %v938, 28
      %v951 = vpop.permute.xlu0 %950
      %952 = vrot.lane.b32.xlu0 %v939, 28
      %v953 = vpop.permute.xlu0 %952
      %954 = vrot.lane.b32.xlu0 %v940, 28
      %v955 = vpop.permute.xlu0 %954
      %vm956 = vcmask 228352
      %v957 = vsel %vm956, %v947, %v949
      %v958 = vsel %vm956, %v949, %v951
      %v959 = vsel %vm956, %v951, %v953
      %v960 = vsel %vm956, %v953, %v955
      %965 = vst [vmem:[#allocation2 + $0x300] sm:$0xff] %v957
      %966 = vst [vmem:[#allocation2 + $0x308] sm:$0xff] %v958
      %967 = vst [vmem:[#allocation2 + $0x310] sm:$0xff] %v959
      %968 = vst [vmem:[#allocation2 + $0x318] sm:$0xff] %v960
      %v969 = vld [vmem:[%s1] sm:$0x3]
      %v970 = vld [vmem:[#allocation2] sm:$0xff]
      %v971 = vld [vmem:[#allocation2 + $0x8] sm:$0xff]
      %v972 = vld [vmem:[#allocation2 + $0x10] sm:$0xff]
      %v973 = vld [vmem:[#allocation2 + $0x18] sm:$0xff]
      %v974 = vld [vmem:[#allocation2 + $0x20] sm:$0xff]
      %v975 = vld [vmem:[#allocation2 + $0x28] sm:$0xff]
      %v976 = vld [vmem:[#allocation2 + $0x30] sm:$0xff]
      %v977 = vld [vmem:[#allocation2 + $0x38] sm:$0xff]
      %v978 = vld [vmem:[#allocation2 + $0x40] sm:$0xff]
      %v979 = vld [vmem:[#allocation2 + $0x48] sm:$0xff]
      %v980 = vld [vmem:[#allocation2 + $0x50] sm:$0xff]
      %v981 = vld [vmem:[#allocation2 + $0x58] sm:$0xff]
      %v982 = vld [vmem:[#allocation2 + $0x60] sm:$0xff]
      %v983 = vld [vmem:[#allocation2 + $0x68] sm:$0xff]
      %v984 = vld [vmem:[#allocation2 + $0x70] sm:$0xff]
      %v985 = vld [vmem:[#allocation2 + $0x78] sm:$0xff]
      %v986 = vld [vmem:[#allocation2 + $0x80] sm:$0xff]
      %v987 = vld [vmem:[#allocation2 + $0x88] sm:$0xff]
      %v988 = vld [vmem:[#allocation2 + $0x90] sm:$0xff]
      %v989 = vld [vmem:[#allocation2 + $0x98] sm:$0xff]
      %v990 = vld [vmem:[#allocation2 + $0xa0] sm:$0xff]
      %v991 = vld [vmem:[#allocation2 + $0xa8] sm:$0xff]
      %v992 = vld [vmem:[#allocation2 + $0xb0] sm:$0xff]
      %v993 = vld [vmem:[#allocation2 + $0xb8] sm:$0xff]
      %v994 = vld [vmem:[#allocation2 + $0xc0] sm:$0xff]
      %v995 = vld [vmem:[#allocation2 + $0xc8] sm:$0xff]
      %v996 = vld [vmem:[#allocation2 + $0xd0] sm:$0xff]
      %v997 = vld [vmem:[#allocation2 + $0xd8] sm:$0xff]
      %v998 = vld [vmem:[#allocation2 + $0xe0] sm:$0xff]
      %v999 = vld [vmem:[#allocation2 + $0xe8] sm:$0xff]
      %v1000 = vld [vmem:[#allocation2 + $0xf0] sm:$0xff]
      %v1001 = vld [vmem:[#allocation2 + $0xf8] sm:$0xff]
      %v1002 = vld [vmem:[#allocation2 + $0x100] sm:$0xff]
      %v1003 = vld [vmem:[#allocation2 + $0x108] sm:$0xff]
      %v1004 = vld [vmem:[#allocation2 + $0x110] sm:$0xff]
      %v1005 = vld [vmem:[#allocation2 + $0x118] sm:$0xff]
      %v1006 = vld [vmem:[#allocation2 + $0x120] sm:$0xff]
      %v1007 = vld [vmem:[#allocation2 + $0x128] sm:$0xff]
      %v1008 = vld [vmem:[#allocation2 + $0x130] sm:$0xff]
      %v1009 = vld [vmem:[#allocation2 + $0x138] sm:$0xff]
      %v1010 = vld [vmem:[#allocation2 + $0x140] sm:$0xff]
      %v1011 = vld [vmem:[#allocation2 + $0x148] sm:$0xff]
      %v1012 = vld [vmem:[#allocation2 + $0x150] sm:$0xff]
      %v1013 = vld [vmem:[#allocation2 + $0x158] sm:$0xff]
      %v1014 = vld [vmem:[#allocation2 + $0x160] sm:$0xff]
      %v1015 = vld [vmem:[#allocation2 + $0x168] sm:$0xff]
      %v1016 = vld [vmem:[#allocation2 + $0x170] sm:$0xff]
      %v1017 = vld [vmem:[#allocation2 + $0x178] sm:$0xff]
      %v1018 = vld [vmem:[#allocation2 + $0x180] sm:$0xff]
      %v1019 = vld [vmem:[#allocation2 + $0x188] sm:$0xff]
      %v1020 = vld [vmem:[#allocation2 + $0x190] sm:$0xff]
      %v1021 = vld [vmem:[#allocation2 + $0x198] sm:$0xff]
      %v1022 = vld [vmem:[#allocation2 + $0x1a0] sm:$0xff]
      %v1023 = vld [vmem:[#allocation2 + $0x1a8] sm:$0xff]
      %v1024 = vld [vmem:[#allocation2 + $0x1b0] sm:$0xff]
      %v1025 = vld [vmem:[#allocation2 + $0x1b8] sm:$0xff]
      %v1026 = vld [vmem:[#allocation2 + $0x1c0] sm:$0xff]
      %v1027 = vld [vmem:[#allocation2 + $0x1c8] sm:$0xff]
      %v1028 = vld [vmem:[#allocation2 + $0x1d0] sm:$0xff]
      %v1029 = vld [vmem:[#allocation2 + $0x1d8] sm:$0xff]
      %v1030 = vld [vmem:[#allocation2 + $0x1e0] sm:$0xff]
      %v1031 = vld [vmem:[#allocation2 + $0x1e8] sm:$0xff]
      %v1032 = vld [vmem:[#allocation2 + $0x1f0] sm:$0xff]
      %v1033 = vld [vmem:[#allocation2 + $0x1f8] sm:$0xff]
      %v1034 = vld [vmem:[#allocation2 + $0x200] sm:$0xff]
      %v1035 = vld [vmem:[#allocation2 + $0x208] sm:$0xff]
      %v1036 = vld [vmem:[#allocation2 + $0x210] sm:$0xff]
      %v1037 = vld [vmem:[#allocation2 + $0x218] sm:$0xff]
      %v1038 = vld [vmem:[#allocation2 + $0x220] sm:$0xff]
      %v1039 = vld [vmem:[#allocation2 + $0x228] sm:$0xff]
      %v1040 = vld [vmem:[#allocation2 + $0x230] sm:$0xff]
      %v1041 = vld [vmem:[#allocation2 + $0x238] sm:$0xff]
      %v1042 = vld [vmem:[#allocation2 + $0x240] sm:$0xff]
      %v1043 = vld [vmem:[#allocation2 + $0x248] sm:$0xff]
      %v1044 = vld [vmem:[#allocation2 + $0x250] sm:$0xff]
      %v1045 = vld [vmem:[#allocation2 + $0x258] sm:$0xff]
      %v1046 = vld [vmem:[#allocation2 + $0x260] sm:$0xff]
      %v1047 = vld [vmem:[#allocation2 + $0x268] sm:$0xff]
      %v1048 = vld [vmem:[#allocation2 + $0x270] sm:$0xff]
      %v1049 = vld [vmem:[#allocation2 + $0x278] sm:$0xff]
      %v1050 = vld [vmem:[#allocation2 + $0x280] sm:$0xff]
      %v1051 = vld [vmem:[#allocation2 + $0x288] sm:$0xff]
      %v1052 = vld [vmem:[#allocation2 + $0x290] sm:$0xff]
      %v1053 = vld [vmem:[#allocation2 + $0x298] sm:$0xff]
      %v1054 = vld [vmem:[#allocation2 + $0x2a0] sm:$0xff]
      %v1055 = vld [vmem:[#allocation2 + $0x2a8] sm:$0xff]
      %v1056 = vld [vmem:[#allocation2 + $0x2b0] sm:$0xff]
      %v1057 = vld [vmem:[#allocation2 + $0x2b8] sm:$0xff]
      %v1058 = vld [vmem:[#allocation2 + $0x2c0] sm:$0xff]
      %v1059 = vld [vmem:[#allocation2 + $0x2c8] sm:$0xff]
      %v1060 = vld [vmem:[#allocation2 + $0x2d0] sm:$0xff]
      %v1061 = vld [vmem:[#allocation2 + $0x2d8] sm:$0xff]
      %v1062 = vld [vmem:[#allocation2 + $0x2e0] sm:$0xff]
      %v1063 = vld [vmem:[#allocation2 + $0x2e8] sm:$0xff]
      %v1064 = vld [vmem:[#allocation2 + $0x2f0] sm:$0xff]
      %v1065 = vld [vmem:[#allocation2 + $0x2f8] sm:$0xff]
      %v1066 = vld [vmem:[#allocation2 + $0x300] sm:$0xff]
      %v1067 = vld [vmem:[#allocation2 + $0x308] sm:$0xff]
      %v1068 = vld [vmem:[#allocation2 + $0x310] sm:$0xff]
      %v1069 = vld [vmem:[#allocation2 + $0x318] sm:$0xff]
      %v1070 = vld [vmem:[%s2] sm:$0xf]
      %v1072 = vperm.slane %v969, 0
      %v1073 = vperm.slane %v969, 1
      %v1076 = vperm.slane %v1070, 0
      %v1077 = vperm.slane %v1070, 1
      %v1078 = vperm.slane %v1070, 2
      %v1079 = vperm.slane %v1070, 3
      %vm1084 = vcmask 588800
      %v1085 = vsel %vm1084, %v1073, 0
      %1087 = vmatpush.msra.mxu0 %v1030
      %1088 = vmatpush.msra.mxu0 %v1026
      %1089 = vmatpush.msra.mxu0 %v1022
      %1090 = vmatpush.msra.mxu0 %v1018
      %1091 = vmatpush.msra.mxu0 %v1014
      %1092 = vmatpush.msra.mxu0 %v1010
      %1093 = vmatpush.msra.mxu0 %v1006
      %1094 = vmatpush.msra.mxu0 %v1002
      %1095 = vmatpush.msra.mxu0 %v998
      %1096 = vmatpush.msra.mxu0 %v994
      %1097 = vmatpush.msra.mxu0 %v990
      %1098 = vmatpush.msra.mxu0 %v986
      %1099 = vmatpush.msra.mxu0 %v982
      %1100 = vmatpush.msra.mxu0 %v978
      %1101 = vmatpush.msra.mxu0 %v974
      %1102 = vmatpush.msra.mxu0 %v970
      %1103 = vmatmul.f32.gmra.mxu0 %v1072
      %v1104 = vpop.f32.mrf.mxu0
      %v1105 = vadd.f32 %v1076, %v1104
      %1106 = vdwg.mxu0
      %1107 = vmatpush.msra.mxu0 0.0
      %1108 = vmatpush.msra.mxu0 0.0
      %1109 = vmatpush.msra.mxu0 0.0
      %1110 = vmatpush.msra.mxu0 0.0
      %1111 = vmatpush.msra.mxu0 0.0
      %1112 = vmatpush.msra.mxu0 0.0
      %1113 = vmatpush.msra.mxu0 0.0
      %1114 = vmatpush.msra.mxu0 %v1066
      %1115 = vmatpush.msra.mxu0 %v1062
      %1116 = vmatpush.msra.mxu0 %v1058
      %1117 = vmatpush.msra.mxu0 %v1054
      %1118 = vmatpush.msra.mxu0 %v1050
      %1119 = vmatpush.msra.mxu0 %v1046
      %1120 = vmatpush.msra.mxu0 %v1042
      %1121 = vmatpush.msra.mxu0 %v1038
      %1122 = vmatpush.msra.mxu0 %v1034
      %1123 = vmatmul.f32.gmra.mxu0 %v1085
      %v1124 = vpop.f32.mrf.mxu0
      %v1125 = vadd.f32 %v1105, %v1124
      %1126 = vdwg.mxu0
      %1127 = vmatpush.msra.mxu0 %v1031
      %1128 = vmatpush.msra.mxu0 %v1027
      %1129 = vmatpush.msra.mxu0 %v1023
      %1130 = vmatpush.msra.mxu0 %v1019
      %1131 = vmatpush.msra.mxu0 %v1015
      %1132 = vmatpush.msra.mxu0 %v1011
      %1133 = vmatpush.msra.mxu0 %v1007
      %1134 = vmatpush.msra.mxu0 %v1003
      %1135 = vmatpush.msra.mxu0 %v999
      %1136 = vmatpush.msra.mxu0 %v995
      %1137 = vmatpush.msra.mxu0 %v991
      %1138 = vmatpush.msra.mxu0 %v987
      %1139 = vmatpush.msra.mxu0 %v983
      %1140 = vmatpush.msra.mxu0 %v979
      %1141 = vmatpush.msra.mxu0 %v975
      %1142 = vmatpush.msra.mxu0 %v971
      %1143 = vmatmul.f32.gmra.mxu0 %v1072
      %v1144 = vpop.f32.mrf.mxu0
      %v1145 = vadd.f32 %v1077, %v1144
      %1146 = vdwg.mxu0
      %1147 = vmatpush.msra.mxu0 0.0
      %1148 = vmatpush.msra.mxu0 0.0
      %1149 = vmatpush.msra.mxu0 0.0
      %1150 = vmatpush.msra.mxu0 0.0
      %1151 = vmatpush.msra.mxu0 0.0
      %1152 = vmatpush.msra.mxu0 0.0
      %1153 = vmatpush.msra.mxu0 0.0
      %1154 = vmatpush.msra.mxu0 %v1067
      %1155 = vmatpush.msra.mxu0 %v1063
      %1156 = vmatpush.msra.mxu0 %v1059
      %1157 = vmatpush.msra.mxu0 %v1055
      %1158 = vmatpush.msra.mxu0 %v1051
      %1159 = vmatpush.msra.mxu0 %v1047
      %1160 = vmatpush.msra.mxu0 %v1043
      %1161 = vmatpush.msra.mxu0 %v1039
      %1162 = vmatpush.msra.mxu0 %v1035
      %1163 = vmatmul.f32.gmra.mxu0 %v1085
      %v1164 = vpop.f32.mrf.mxu0
      %v1165 = vadd.f32 %v1145, %v1164
      %1166 = vdwg.mxu0
      %1167 = vmatpush.msra.mxu0 %v1032
      %1168 = vmatpush.msra.mxu0 %v1028
      %1169 = vmatpush.msra.mxu0 %v1024
      %1170 = vmatpush.msra.mxu0 %v1020
      %1171 = vmatpush.msra.mxu0 %v1016
      %1172 = vmatpush.msra.mxu0 %v1012
      %1173 = vmatpush.msra.mxu0 %v1008
      %1174 = vmatpush.msra.mxu0 %v1004
      %1175 = vmatpush.msra.mxu0 %v1000
      %1176 = vmatpush.msra.mxu0 %v996
      %1177 = vmatpush.msra.mxu0 %v992
      %1178 = vmatpush.msra.mxu0 %v988
      %1179 = vmatpush.msra.mxu0 %v984
      %1180 = vmatpush.msra.mxu0 %v980
      %1181 = vmatpush.msra.mxu0 %v976
      %1182 = vmatpush.msra.mxu0 %v972
      %1183 = vmatmul.f32.gmra.mxu0 %v1072
      %v1184 = vpop.f32.mrf.mxu0
      %v1185 = vadd.f32 %v1078, %v1184
      %1186 = vdwg.mxu0
      %1187 = vmatpush.msra.mxu0 0.0
      %1188 = vmatpush.msra.mxu0 0.0
      %1189 = vmatpush.msra.mxu0 0.0
      %1190 = vmatpush.msra.mxu0 0.0
      %1191 = vmatpush.msra.mxu0 0.0
      %1192 = vmatpush.msra.mxu0 0.0
      %1193 = vmatpush.msra.mxu0 0.0
      %1194 = vmatpush.msra.mxu0 %v1068
      %1195 = vmatpush.msra.mxu0 %v1064
      %1196 = vmatpush.msra.mxu0 %v1060
      %1197 = vmatpush.msra.mxu0 %v1056
      %1198 = vmatpush.msra.mxu0 %v1052
      %1199 = vmatpush.msra.mxu0 %v1048
      %1200 = vmatpush.msra.mxu0 %v1044
      %1201 = vmatpush.msra.mxu0 %v1040
      %1202 = vmatpush.msra.mxu0 %v1036
      %1203 = vmatmul.f32.gmra.mxu0 %v1085
      %v1204 = vpop.f32.mrf.mxu0
      %v1205 = vadd.f32 %v1185, %v1204
      %1206 = vdwg.mxu0
      %1207 = vmatpush.msra.mxu0 %v1033
      %1208 = vmatpush.msra.mxu0 %v1029
      %1209 = vmatpush.msra.mxu0 %v1025
      %1210 = vmatpush.msra.mxu0 %v1021
      %1211 = vmatpush.msra.mxu0 %v1017
      %1212 = vmatpush.msra.mxu0 %v1013
      %1213 = vmatpush.msra.mxu0 %v1009
      %1214 = vmatpush.msra.mxu0 %v1005
      %1215 = vmatpush.msra.mxu0 %v1001
      %1216 = vmatpush.msra.mxu0 %v997
      %1217 = vmatpush.msra.mxu0 %v993
      %1218 = vmatpush.msra.mxu0 %v989
      %1219 = vmatpush.msra.mxu0 %v985
      %1220 = vmatpush.msra.mxu0 %v981
      %1221 = vmatpush.msra.mxu0 %v977
      %1222 = vmatpush.msra.mxu0 %v973
      %1223 = vmatmul.f32.gmra.mxu0 %v1072
      %v1224 = vpop.f32.mrf.mxu0
      %v1225 = vadd.f32 %v1079, %v1224
      %1226 = vdwg.mxu0
      %1227 = vmatpush.msra.mxu0 0.0
      %1228 = vmatpush.msra.mxu0 0.0
      %1229 = vmatpush.msra.mxu0 0.0
      %1230 = vmatpush.msra.mxu0 0.0
      %1231 = vmatpush.msra.mxu0 0.0
      %1232 = vmatpush.msra.mxu0 0.0
      %1233 = vmatpush.msra.mxu0 0.0
      %1234 = vmatpush.msra.mxu0 %v1069
      %1235 = vmatpush.msra.mxu0 %v1065
      %1236 = vmatpush.msra.mxu0 %v1061
      %1237 = vmatpush.msra.mxu0 %v1057
      %1238 = vmatpush.msra.mxu0 %v1053
      %1239 = vmatpush.msra.mxu0 %v1049
      %1240 = vmatpush.msra.mxu0 %v1045
      %1241 = vmatpush.msra.mxu0 %v1041
      %1242 = vmatpush.msra.mxu0 %v1037
      %1243 = vmatmul.f32.gmra.mxu0 %v1085
      %v1244 = vpop.f32.mrf.mxu0
      %v1245 = vadd.f32 %v1225, %v1244
      %1246 = vdwg.mxu0
      %v1251 = vrot.slane %v1165, 7
      %v1252 = vrot.slane %v1205, 6
      %v1253 = vrot.slane %v1245, 5
      %vm1254 = vcmask 1040384
      %v1255 = vsel %vm1254, %v1125, %v1251
      %vm1256 = vcmask 1042434
      %v1257 = vsel %vm1256, %v1252, %v1253
      %vm1258 = vcmask 1041408
      %v1259 = vsel %vm1258, %v1255, %v1257
      %v1261 = vlaneseq
      %vm1262 = vcmp.ge.s32.totalorder %v1261, 0
      %vm1263 = vcmp.lt.s32.totalorder %v1261, 512
      %vm1264 = vmand %vm1262, %vm1263
      %1265 = vst.msk [vmem:[%s168] sm:$0xf] %vm1264, %v1259
      %p1266 = scmp.lt.s32.totalorder %s14, 1
      %s1267 = scalar_select %p1266, %s14, 1
      %s1268 = smul.addr %s1267, 4
      %s1269 = scalar_lea.vmem %s3, %s1268
      // Predicated region
      $region33: #{_decoder_pallas.1} parent=31 // pred_check
        %p1270 = pneg %p100
      $region34: #{_decoder_pallas.1} parent=31 // pred_check_branch
        %1272 = sbr.rel (%p1270) target = $region36
      $region35: #{_decoder_pallas.1} parent=31 // pred_region
        _
      $region36: #{_decoder_pallas.1} parent=31 // pred_fallthru
        _
    $region32: #{_decoder_pallas.1} parent=5 // pred_fallthru
      _
    %p1273 = scmp.le.s32.totalorder 2, %s9
    // Predicated region
    $region37: #{_decoder_pallas.1} parent=5 // pred_check
      %p1274 = pneg %p1273
    $region38: #{_decoder_pallas.1} parent=5 // pred_check_branch
      %1276 = sbr.rel (%p1274) target = $region40
    $region39: #{_decoder_pallas.1} parent=5 // pred_region
      %s1277 = ssub.s32 %s9, 2
      // Predicated region
      $region41: #{_decoder_pallas.1} parent=39 // pred_check
        %p1278 = pneg %p106
      $region42: #{_decoder_pallas.1} parent=39 // pred_check_branch
        %1280 = sbr.rel (%p1278) target = $region44
      $region43: #{_decoder_pallas.1} parent=39 // pred_region
        %p1281 = scmp.lt.s32.totalorder %s15, 1
        %s1282 = scalar_select %p1281, %s15, 1
        %s1283 = smul.addr %s1282, 4
        %s1284 = scalar_lea.vmem %s3, %s1283
      $region44: #{_decoder_pallas.1} parent=39 // pred_fallthru
        _
    $region40: #{_decoder_pallas.1} parent=5 // pred_fallthru
      _
  $region6: #{_decoder_pallas.1} parent=0 // loop_footer
    %s13 = sadd.s32 1, %s9
  $region7: #{_decoder_pallas.1} parent=0 // loop_footer_branch
    %8 = sbr.rel target = $region3
  $region8: #{_decoder_pallas.1} parent=0 // loop_exit
    _

</llo_original>
